<compile_context>
chip_gen: v5e
topology: v5e:2x2
jax: 0.10.0
libtpu: 0.0.40
codegen_flags: <defaults>
</compile_context>

<pallas_src>
import functools
import math

import jax
import jax.numpy as jnp
import numpy as np
from jax.experimental import pallas as pl
from jax.experimental.pallas import tpu as pltpu

LN_EPS = 1e-5  # PyTorch nn.LayerNorm default


def _layernorm(x, w, b):
    mu = jnp.mean(x, axis=-1, keepdims=True)
    var = jnp.mean(jnp.square(x - mu), axis=-1, keepdims=True)
    return (x - mu) * jax.lax.rsqrt(var + LN_EPS) * w + b


def _gelu_tanh(x):
    # tanh-approx GELU: tanh lowers to the (otherwise idle) EUP slot instead of
    # ~10 VALU ops/element for an erf polynomial.  |exact - approx| < 3e-3.
    c = math.sqrt(2.0 / math.pi)
    return 0.5 * x * (1.0 + jnp.tanh(c * (x + 0.044715 * x * x * x)))


# --------------------------------------------------------------------------
# Fused kernel: one batch element per grid step.
#   x = x + Attention(LN1(x));  x = x + Mlp(LN2(x))
# --------------------------------------------------------------------------
def _fused_block_kernel(x_ref, ln1_w_ref, ln1_b_ref, wqkv_ref, bqkv_ref,
                        wp_ref, bp_ref, rpe_ref, ln2_w_ref, ln2_b_ref,
                        w1_ref, b1_ref, w2_ref, b2_ref, o_ref,
                        *, num_heads, head_dim):
    f32, bf16 = jnp.float32, jnp.bfloat16
    H, hd = num_heads, head_dim

    x = x_ref[0].astype(f32)                                    # (N, C)
    N, C = x.shape

    # ---------------- attention sub-block ----------------
    xn = _layernorm(x, ln1_w_ref[...], ln1_b_ref[...]).astype(bf16)
    # ONE lane-dense, full-depth QKV matmul (softmax scale folded into Q third)
    qkv = (jnp.dot(xn, wqkv_ref[...], preferred_element_type=f32)
           + bqkv_ref[...]).astype(bf16)                        # (N, 3C)

    head_out = []
    for h in range(H):                                          # static unroll
        q_h = qkv[:, h * hd:(h + 1) * hd]                       # (N, hd) bf16
        k_h = qkv[:, C + h * hd:C + (h + 1) * hd]
        v_h = qkv[:, 2 * C + h * hd:2 * C + (h + 1) * hd]
        # q @ k^T without an explicit transpose (contract last dims on MXU)
        s = jax.lax.dot_general(q_h, k_h, (((1,), (1,)), ((), ())),
                                preferred_element_type=f32)     # (N, N) f32
        s = s + rpe_ref[h]                  # bf16 RPE bias, promoted in the add
        p = jnp.exp(s - jnp.max(s, axis=-1, keepdims=True))
        p = p * pl.reciprocal(jnp.sum(p, axis=-1, keepdims=True), approx=True)
        head_out.append(jnp.dot(p.astype(bf16), v_h,
                                preferred_element_type=f32).astype(bf16))
    attn_out = jnp.concatenate(head_out, axis=-1)               # (N, C) bf16
    # ONE full-depth output projection (contraction depth C, lane-dense C out)
    x = x + (jnp.dot(attn_out, wp_ref[...], preferred_element_type=f32)
             + bp_ref[...])

    # ---------------- MLP sub-block ----------------
    xn2 = _layernorm(x, ln2_w_ref[...], ln2_b_ref[...]).astype(bf16)
    h1 = jnp.dot(xn2, w1_ref[...], preferred_element_type=f32) + b1_ref[...]
    h1 = _gelu_tanh(h1.astype(bf16))                            # bf16 VPU/EUP
    y2 = jnp.dot(h1, w2_ref[...], preferred_element_type=f32) + b2_ref[...]
    o_ref[0] = (x + y2).astype(o_ref.dtype)


# --------------------------------------------------------------------------
# Wrapper: parameter re-layout (scale folding, bf16 casts) happens here.
# --------------------------------------------------------------------------
def block_with_rpe_forward(x, params, *, num_heads):
    B, N, C = x.shape
    H = num_heads
    hd = C // H
    scale = hd ** -0.5
    Dh = params["w1"].shape[1]
    f32, bf16 = jnp.float32, jnp.bfloat16

    # fold the softmax scale into the Q third of the fused QKV projection
    qmask = jnp.concatenate([jnp.full((C,), scale, f32), jnp.ones((2 * C,), f32)])
    wqkv = (params["wqkv"].astype(f32) * qmask[None, :]).astype(bf16)     # (C, 3C)
    bqkv = params["bqkv"].astype(f32).reshape(1, 3 * C) * qmask[None, :]  # (1, 3C)

    wp = params["wproj"].astype(bf16)                 # (C, C)
    bp = params["bproj"].astype(f32)                  # (1, C)
    rpe = params["rpe_bias"].astype(bf16)             # (H, N, N)
    w1, b1 = params["w1"].astype(bf16), params["b1"].astype(f32)
    w2, b2 = params["w2"].astype(bf16), params["b2"].astype(f32)

    def rep(shape):
        # grid-invariant (replicated) operand; constant index map -> no re-DMA.
        # TODO(synk): pipeline_mode=pl.Buffered(1) here would also drop the
        # second resident VMEM copy of each weight once verified on target jax.
        return pl.BlockSpec(shape, lambda b, _n=len(shape): (0,) * _n)

    tok_spec = pl.BlockSpec((1, N, C), lambda b: (b, 0, 0))

    kernel = functools.partial(_fused_block_kernel, num_heads=H, head_dim=hd)
    fn = pl.pallas_call(
        kernel,
        out_shape=jax.ShapeDtypeStruct((B, N, C), x.dtype),
        grid=(B,),
        in_specs=[
            tok_spec,                                   # x
            rep((1, C)), rep((1, C)),                   # norm1 w/b
            rep((C, 3 * C)), rep((1, 3 * C)),           # fused QKV w/b
            rep((C, C)), rep((1, C)),                   # proj w/b
            rep((H, N, N)),                             # relative position bias
            rep((1, C)), rep((1, C)),                   # norm2 w/b
            rep((C, Dh)), rep((1, Dh)),                 # fc1 w/b
            rep((Dh, C)), rep((1, C)),                  # fc2 w/b
        ],
        out_specs=tok_spec,
        input_output_aliases={0: 0},                    # residual buffer reuse
        compiler_params=pltpu.CompilerParams(
            dimension_semantics=("parallel",),
            # above the 16/32 MiB scoped defaults, below v7x's 64 MiB physical.
            vmem_limit_bytes=56 * 1024 * 1024),
    )
    return fn(x, params["ln1_w"], params["ln1_b"], wqkv, bqkv, wp, bp, rpe,
              params["ln2_w"], params["ln2_b"], w1, b1, w2, b2)


# --------------------------------------------------------------------------
# Deterministic parameter construction (matches __init__ shapes)
# --------------------------------------------------------------------------
def make_params(key, input_size, dim, num_heads, mlp_ratio=4.0):
    N = input_size * input_size
    Dh = int(dim * mlp_ratio)
    f32 = jnp.float32
    ks = jax.random.split(key, 9)

    def nrm(k, shape, std=0.02):
        return (std * jax.random.normal(k, shape)).astype(f32)

    params = dict(
        ln1_w=jnp.ones((1, dim), f32), ln1_b=jnp.zeros((1, dim), f32),
        ln2_w=jnp.ones((1, dim), f32), ln2_b=jnp.zeros((1, dim), f32),
        wqkv=nrm(ks[0], (dim, 3 * dim)), bqkv=nrm(ks[1], (1, 3 * dim)),
        wproj=nrm(ks[2], (dim, dim)), bproj=nrm(ks[3], (1, dim)),
        w1=nrm(ks[4], (dim, Dh)), b1=nrm(ks[5], (1, Dh)),
        w2=nrm(ks[6], (Dh, dim)), b2=nrm(ks[7], (1, dim)),
    )

    # relative_position_bias_table + relative_position_index gather (setup glue)
    table = nrm(ks[8], ((2 * input_size - 1) ** 2, num_heads))
    coords = jnp.stack(jnp.meshgrid(jnp.arange(input_size),
                                    jnp.arange(input_size), indexing="ij"))
    coords_flatten = coords.reshape(2, -1)                         # (2, N)
    rel = coords_flatten[:, :, None] - coords_flatten[:, None, :]  # (2, N, N)
    rel = rel.transpose(1, 2, 0)
    rel = rel.at[:, :, 0].add(input_size - 1)
    rel = rel.at[:, :, 1].add(input_size - 1)
    rel = rel.at[:, :, 0].multiply(2 * input_size - 1)
    rpi = rel.sum(-1).reshape(-1)                                  # (N*N,)
    bias = table[rpi].reshape(N, N, num_heads).transpose(2, 0, 1)  # (H, N, N)
    params["rpe_bias"] = bias.astype(f32)
    return params


# --------------------------------------------------------------------------
# Pure-JAX reference (mirrors the PyTorch forward, all f32, exact GELU)
# --------------------------------------------------------------------------
def reference_forward(x, params, num_heads):
    B, N, C = x.shape
    head_dim = C // num_heads
    scale = head_dim ** -0.5

    def ln(v, w, b):
        mu = v.mean(-1, keepdims=True)
        var = ((v - mu) ** 2).mean(-1, keepdims=True)
        return (v - mu) / jnp.sqrt(var + LN_EPS) * w + b

    xn = ln(x, params["ln1_w"], params["ln1_b"])
    qkv = xn @ params["wqkv"] + params["bqkv"]
    qkv = qkv.reshape(B, N, 3, num_heads, head_dim).transpose(2, 0, 3, 1, 4)
    q, k, v = qkv[0] * scale, qkv[1], qkv[2]
    attn = jnp.einsum("bhqd,bhkd->bhqk", q, k) + params["rpe_bias"][None]
    attn = jax.nn.softmax(attn, axis=-1)
    o = jnp.einsum("bhqk,bhkd->bhqd", attn, v)
    o = o.transpose(0, 2, 1, 3).reshape(B, N, C)
    o = o @ params["wproj"] + params["bproj"]
    x = x + o

    xn = ln(x, params["ln2_w"], params["ln2_b"])
    h = xn @ params["w1"] + params["b1"]
    h = jax.nn.gelu(h, approximate=False)
    o = h @ params["w2"] + params["b2"]
    return x + o


if __name__ == "__main__":
    input_size = 4            # 4x4 token grid -> N = 16
    dim = 32
    num_heads = 4
    B = 2
    N = input_size * input_size

    key = jax.random.PRNGKey(0)
    kx, kp = jax.random.split(key)
    x = jax.random.normal(kx, (B, N, dim), dtype=jnp.float32)
    params = make_params(kp, input_size, dim, num_heads)

    fwd = jax.jit(functools.partial(block_with_rpe_forward, num_heads=num_heads))
    out = jax.block_until_ready(fwd(x, params))

    ref = reference_forward(x, params, num_heads)
    np.testing.assert_allclose(np.asarray(out), np.asarray(ref),
                               rtol=2e-2, atol=2e-2)
    print("KERNEL_OK")
</pallas_src>

<mosaic_0001>
module attributes {stable_mosaic.version = 11 : i64} {
  func.func @_fused_block_kernel(%arg0: i32, %arg1: memref<1x16x32xf32, #tpu.memory_space<vmem>>, %arg2: memref<1x32xf32, #tpu.memory_space<vmem>>, %arg3: memref<1x32xf32, #tpu.memory_space<vmem>>, %arg4: memref<32x96xbf16, #tpu.memory_space<vmem>>, %arg5: memref<1x96xf32, #tpu.memory_space<vmem>>, %arg6: memref<32x32xbf16, #tpu.memory_space<vmem>>, %arg7: memref<1x32xf32, #tpu.memory_space<vmem>>, %arg8: memref<4x16x16xbf16, #tpu.memory_space<vmem>>, %arg9: memref<1x32xf32, #tpu.memory_space<vmem>>, %arg10: memref<1x32xf32, #tpu.memory_space<vmem>>, %arg11: memref<32x128xbf16, #tpu.memory_space<vmem>>, %arg12: memref<1x128xf32, #tpu.memory_space<vmem>>, %arg13: memref<128x32xbf16, #tpu.memory_space<vmem>>, %arg14: memref<1x32xf32, #tpu.memory_space<vmem>>, %arg15: memref<1x16x32xf32, #tpu.memory_space<vmem>>) attributes {dimension_semantics = [#tpu.dimension_semantics<parallel>], iteration_bounds = array<i64: 2>, scalar_prefetch = 0 : i64, scratch_operands = 0 : i64, tpu.core_type = #tpu.core_type<tc>, window_params = [{transform_indices = @transform_0, window_bounds = array<i64: 1, 16, 32>}, {pipeline_mode = #tpu.pipeline_mode<synchronous>, transform_indices = @transform_1, window_bounds = array<i64: 1, 32>}, {pipeline_mode = #tpu.pipeline_mode<synchronous>, transform_indices = @transform_2, window_bounds = array<i64: 1, 32>}, {pipeline_mode = #tpu.pipeline_mode<synchronous>, transform_indices = @transform_3, window_bounds = array<i64: 32, 96>}, {pipeline_mode = #tpu.pipeline_mode<synchronous>, transform_indices = @transform_4, window_bounds = array<i64: 1, 96>}, {pipeline_mode = #tpu.pipeline_mode<synchronous>, transform_indices = @transform_5, window_bounds = array<i64: 32, 32>}, {pipeline_mode = #tpu.pipeline_mode<synchronous>, transform_indices = @transform_6, window_bounds = array<i64: 1, 32>}, {pipeline_mode = #tpu.pipeline_mode<synchronous>, transform_indices = @transform_7, window_bounds = array<i64: 4, 16, 16>}, {pipeline_mode = #tpu.pipeline_mode<synchronous>, transform_indices = @transform_8, window_bounds = array<i64: 1, 32>}, {pipeline_mode = #tpu.pipeline_mode<synchronous>, transform_indices = @transform_9, window_bounds = array<i64: 1, 32>}, {pipeline_mode = #tpu.pipeline_mode<synchronous>, transform_indices = @transform_10, window_bounds = array<i64: 32, 128>}, {pipeline_mode = #tpu.pipeline_mode<synchronous>, transform_indices = @transform_11, window_bounds = array<i64: 1, 128>}, {pipeline_mode = #tpu.pipeline_mode<synchronous>, transform_indices = @transform_12, window_bounds = array<i64: 128, 32>}, {pipeline_mode = #tpu.pipeline_mode<synchronous>, transform_indices = @transform_13, window_bounds = array<i64: 1, 32>}, {transform_indices = @transform_14, window_bounds = array<i64: 1, 16, 32>}]} {
    %c0 = arith.constant 0 : index
    %c0_0 = arith.constant 0 : index
    %c0_1 = arith.constant 0 : index
    %0 = vector.load %arg1[%c0, %c0_0, %c0_1] : memref<1x16x32xf32, #tpu.memory_space<vmem>>, vector<1x16x32xf32>
    %1 = vector.shape_cast %0 : vector<1x16x32xf32> to vector<16x32xf32>
    %c0_2 = arith.constant 0 : index
    %c0_3 = arith.constant 0 : index
    %2 = vector.load %arg2[%c0_2, %c0_3] : memref<1x32xf32, #tpu.memory_space<vmem>>, vector<1x32xf32>
    %c0_4 = arith.constant 0 : index
    %c0_5 = arith.constant 0 : index
    %3 = vector.load %arg3[%c0_4, %c0_5] : memref<1x32xf32, #tpu.memory_space<vmem>>, vector<1x32xf32>
    %cst = arith.constant dense<0.000000e+00> : vector<16xf32>
    %4 = vector.multi_reduction <add>, %1, %cst [1] : vector<16x32xf32> to vector<16xf32>
    %5 = vector.shape_cast %4 : vector<16xf32> to vector<16x1xf32>
    %cst_6 = arith.constant 3.200000e+01 : f32
    %6 = vector.broadcast %cst_6 : f32 to vector<16x1xf32>
    %7 = arith.divf %5, %6 : vector<16x1xf32>
    %8 = vector.broadcast %7 : vector<16x1xf32> to vector<16x32xf32>
    %9 = arith.subf %1, %8 : vector<16x32xf32>
    %10 = arith.mulf %9, %9 : vector<16x32xf32>
    %cst_7 = arith.constant dense<0.000000e+00> : vector<16xf32>
    %11 = vector.multi_reduction <add>, %10, %cst_7 [1] : vector<16x32xf32> to vector<16xf32>
    %12 = vector.shape_cast %11 : vector<16xf32> to vector<16x1xf32>
    %cst_8 = arith.constant 3.200000e+01 : f32
    %13 = vector.broadcast %cst_8 : f32 to vector<16x1xf32>
    %14 = arith.divf %12, %13 : vector<16x1xf32>
    %15 = vector.broadcast %7 : vector<16x1xf32> to vector<16x32xf32>
    %16 = arith.subf %1, %15 : vector<16x32xf32>
    %cst_9 = arith.constant 9.99999974E-6 : f32
    %17 = vector.broadcast %cst_9 : f32 to vector<16x1xf32>
    %18 = arith.addf %14, %17 : vector<16x1xf32>
    %19 = math.rsqrt %18 : vector<16x1xf32>
    %20 = vector.broadcast %19 : vector<16x1xf32> to vector<16x32xf32>
    %21 = arith.mulf %16, %20 : vector<16x32xf32>
    %22 = vector.broadcast %2 : vector<1x32xf32> to vector<16x32xf32>
    %23 = arith.mulf %21, %22 : vector<16x32xf32>
    %24 = vector.broadcast %3 : vector<1x32xf32> to vector<16x32xf32>
    %25 = arith.addf %23, %24 : vector<16x32xf32>
    %26 = arith.truncf %25 : vector<16x32xf32> to vector<16x32xbf16>
    %c0_10 = arith.constant 0 : index
    %c0_11 = arith.constant 0 : index
    %27 = vector.load %arg4[%c0_10, %c0_11] : memref<32x96xbf16, #tpu.memory_space<vmem>>, vector<32x96xbf16>
    %cst_12 = arith.constant dense<0.000000e+00> : vector<16x96xf32>
    %28 = tpu.matmul %26, %27, %cst_12 {dimension_numbers = #tpu.dot_dimension_numbers<[1], [0], [0], [1], [0, 0, 1, 1], [], []>} : vector<16x32xbf16>, vector<32x96xbf16>, vector<16x96xf32> -> vector<16x96xf32>
    %c0_13 = arith.constant 0 : index
    %c0_14 = arith.constant 0 : index
    %29 = vector.load %arg5[%c0_13, %c0_14] : memref<1x96xf32, #tpu.memory_space<vmem>>, vector<1x96xf32>
    %30 = vector.broadcast %29 : vector<1x96xf32> to vector<16x96xf32>
    %31 = arith.addf %28, %30 : vector<16x96xf32>
    %32 = arith.truncf %31 : vector<16x96xf32> to vector<16x96xbf16>
    %33 = vector.extract_strided_slice %32 {offsets = [0, 0], sizes = [16, 8], strides = [1, 1]} : vector<16x96xbf16> to vector<16x8xbf16>
    %34 = vector.extract_strided_slice %32 {offsets = [0, 32], sizes = [16, 8], strides = [1, 1]} : vector<16x96xbf16> to vector<16x8xbf16>
    %35 = vector.extract_strided_slice %32 {offsets = [0, 64], sizes = [16, 8], strides = [1, 1]} : vector<16x96xbf16> to vector<16x8xbf16>
    %cst_15 = arith.constant dense<0.000000e+00> : vector<16x16xf32>
    %36 = tpu.matmul %33, %34, %cst_15 {dimension_numbers = #tpu.dot_dimension_numbers<[1], [1], [0], [0], [0, 0, 1, 0], [], []>} : vector<16x8xbf16>, vector<16x8xbf16>, vector<16x16xf32> -> vector<16x16xf32>
    %c0_16 = arith.constant 0 : index
    %c0_17 = arith.constant 0 : index
    %c0_18 = arith.constant 0 : index
    %37 = vector.load %arg8[%c0_16, %c0_17, %c0_18] : memref<4x16x16xbf16, #tpu.memory_space<vmem>>, vector<1x16x16xbf16>
    %38 = vector.shape_cast %37 : vector<1x16x16xbf16> to vector<16x16xbf16>
    %39 = arith.extf %38 : vector<16x16xbf16> to vector<16x16xf32>
    %40 = arith.addf %36, %39 : vector<16x16xf32>
    %cst_19 = arith.constant dense<0xFF800000> : vector<16xf32>
    %41 = vector.multi_reduction <maximumf>, %40, %cst_19 [1] : vector<16x16xf32> to vector<16xf32>
    %42 = vector.shape_cast %41 : vector<16xf32> to vector<16x1xf32>
    %43 = vector.broadcast %42 : vector<16x1xf32> to vector<16x16xf32>
    %44 = arith.subf %40, %43 : vector<16x16xf32>
    %45 = math.exp %44 : vector<16x16xf32>
    %cst_20 = arith.constant dense<0.000000e+00> : vector<16xf32>
    %46 = vector.multi_reduction <add>, %45, %cst_20 [1] : vector<16x16xf32> to vector<16xf32>
    %47 = vector.shape_cast %46 : vector<16xf32> to vector<16x1xf32>
    %48 = tpu.reciprocal %47 {approx = true} : vector<16x1xf32> -> vector<16x1xf32>
    %49 = vector.broadcast %48 : vector<16x1xf32> to vector<16x16xf32>
    %50 = arith.mulf %45, %49 : vector<16x16xf32>
    %51 = arith.truncf %50 : vector<16x16xf32> to vector<16x16xbf16>
    %cst_21 = arith.constant dense<0.000000e+00> : vector<16x8xf32>
    %52 = tpu.matmul %51, %35, %cst_21 {dimension_numbers = #tpu.dot_dimension_numbers<[1], [0], [0], [1], [0, 0, 1, 1], [], []>} : vector<16x16xbf16>, vector<16x8xbf16>, vector<16x8xf32> -> vector<16x8xf32>
    %53 = arith.truncf %52 : vector<16x8xf32> to vector<16x8xbf16>
    %54 = vector.extract_strided_slice %32 {offsets = [0, 8], sizes = [16, 8], strides = [1, 1]} : vector<16x96xbf16> to vector<16x8xbf16>
    %55 = vector.extract_strided_slice %32 {offsets = [0, 40], sizes = [16, 8], strides = [1, 1]} : vector<16x96xbf16> to vector<16x8xbf16>
    %56 = vector.extract_strided_slice %32 {offsets = [0, 72], sizes = [16, 8], strides = [1, 1]} : vector<16x96xbf16> to vector<16x8xbf16>
    %cst_22 = arith.constant dense<0.000000e+00> : vector<16x16xf32>
    %57 = tpu.matmul %54, %55, %cst_22 {dimension_numbers = #tpu.dot_dimension_numbers<[1], [1], [0], [0], [0, 0, 1, 0], [], []>} : vector<16x8xbf16>, vector<16x8xbf16>, vector<16x16xf32> -> vector<16x16xf32>
    %c1 = arith.constant 1 : index
    %c0_23 = arith.constant 0 : index
    %c0_24 = arith.constant 0 : index
    %58 = vector.load %arg8[%c1, %c0_23, %c0_24] : memref<4x16x16xbf16, #tpu.memory_space<vmem>>, vector<1x16x16xbf16>
    %59 = vector.shape_cast %58 : vector<1x16x16xbf16> to vector<16x16xbf16>
    %60 = arith.extf %59 : vector<16x16xbf16> to vector<16x16xf32>
    %61 = arith.addf %57, %60 : vector<16x16xf32>
    %cst_25 = arith.constant dense<0xFF800000> : vector<16xf32>
    %62 = vector.multi_reduction <maximumf>, %61, %cst_25 [1] : vector<16x16xf32> to vector<16xf32>
    %63 = vector.shape_cast %62 : vector<16xf32> to vector<16x1xf32>
    %64 = vector.broadcast %63 : vector<16x1xf32> to vector<16x16xf32>
    %65 = arith.subf %61, %64 : vector<16x16xf32>
    %66 = math.exp %65 : vector<16x16xf32>
    %cst_26 = arith.constant dense<0.000000e+00> : vector<16xf32>
    %67 = vector.multi_reduction <add>, %66, %cst_26 [1] : vector<16x16xf32> to vector<16xf32>
    %68 = vector.shape_cast %67 : vector<16xf32> to vector<16x1xf32>
    %69 = tpu.reciprocal %68 {approx = true} : vector<16x1xf32> -> vector<16x1xf32>
    %70 = vector.broadcast %69 : vector<16x1xf32> to vector<16x16xf32>
    %71 = arith.mulf %66, %70 : vector<16x16xf32>
    %72 = arith.truncf %71 : vector<16x16xf32> to vector<16x16xbf16>
    %cst_27 = arith.constant dense<0.000000e+00> : vector<16x8xf32>
    %73 = tpu.matmul %72, %56, %cst_27 {dimension_numbers = #tpu.dot_dimension_numbers<[1], [0], [0], [1], [0, 0, 1, 1], [], []>} : vector<16x16xbf16>, vector<16x8xbf16>, vector<16x8xf32> -> vector<16x8xf32>
    %74 = arith.truncf %73 : vector<16x8xf32> to vector<16x8xbf16>
    %75 = vector.extract_strided_slice %32 {offsets = [0, 16], sizes = [16, 8], strides = [1, 1]} : vector<16x96xbf16> to vector<16x8xbf16>
    %76 = vector.extract_strided_slice %32 {offsets = [0, 48], sizes = [16, 8], strides = [1, 1]} : vector<16x96xbf16> to vector<16x8xbf16>
    %77 = vector.extract_strided_slice %32 {offsets = [0, 80], sizes = [16, 8], strides = [1, 1]} : vector<16x96xbf16> to vector<16x8xbf16>
    %cst_28 = arith.constant dense<0.000000e+00> : vector<16x16xf32>
    %78 = tpu.matmul %75, %76, %cst_28 {dimension_numbers = #tpu.dot_dimension_numbers<[1], [1], [0], [0], [0, 0, 1, 0], [], []>} : vector<16x8xbf16>, vector<16x8xbf16>, vector<16x16xf32> -> vector<16x16xf32>
    %c2 = arith.constant 2 : index
    %c0_29 = arith.constant 0 : index
    %c0_30 = arith.constant 0 : index
    %79 = vector.load %arg8[%c2, %c0_29, %c0_30] : memref<4x16x16xbf16, #tpu.memory_space<vmem>>, vector<1x16x16xbf16>
    %80 = vector.shape_cast %79 : vector<1x16x16xbf16> to vector<16x16xbf16>
    %81 = arith.extf %80 : vector<16x16xbf16> to vector<16x16xf32>
    %82 = arith.addf %78, %81 : vector<16x16xf32>
    %cst_31 = arith.constant dense<0xFF800000> : vector<16xf32>
    %83 = vector.multi_reduction <maximumf>, %82, %cst_31 [1] : vector<16x16xf32> to vector<16xf32>
    %84 = vector.shape_cast %83 : vector<16xf32> to vector<16x1xf32>
    %85 = vector.broadcast %84 : vector<16x1xf32> to vector<16x16xf32>
    %86 = arith.subf %82, %85 : vector<16x16xf32>
    %87 = math.exp %86 : vector<16x16xf32>
    %cst_32 = arith.constant dense<0.000000e+00> : vector<16xf32>
    %88 = vector.multi_reduction <add>, %87, %cst_32 [1] : vector<16x16xf32> to vector<16xf32>
    %89 = vector.shape_cast %88 : vector<16xf32> to vector<16x1xf32>
    %90 = tpu.reciprocal %89 {approx = true} : vector<16x1xf32> -> vector<16x1xf32>
    %91 = vector.broadcast %90 : vector<16x1xf32> to vector<16x16xf32>
    %92 = arith.mulf %87, %91 : vector<16x16xf32>
    %93 = arith.truncf %92 : vector<16x16xf32> to vector<16x16xbf16>
    %cst_33 = arith.constant dense<0.000000e+00> : vector<16x8xf32>
    %94 = tpu.matmul %93, %77, %cst_33 {dimension_numbers = #tpu.dot_dimension_numbers<[1], [0], [0], [1], [0, 0, 1, 1], [], []>} : vector<16x16xbf16>, vector<16x8xbf16>, vector<16x8xf32> -> vector<16x8xf32>
    %95 = arith.truncf %94 : vector<16x8xf32> to vector<16x8xbf16>
    %96 = vector.extract_strided_slice %32 {offsets = [0, 24], sizes = [16, 8], strides = [1, 1]} : vector<16x96xbf16> to vector<16x8xbf16>
    %97 = vector.extract_strided_slice %32 {offsets = [0, 56], sizes = [16, 8], strides = [1, 1]} : vector<16x96xbf16> to vector<16x8xbf16>
    %98 = vector.extract_strided_slice %32 {offsets = [0, 88], sizes = [16, 8], strides = [1, 1]} : vector<16x96xbf16> to vector<16x8xbf16>
    %cst_34 = arith.constant dense<0.000000e+00> : vector<16x16xf32>
    %99 = tpu.matmul %96, %97, %cst_34 {dimension_numbers = #tpu.dot_dimension_numbers<[1], [1], [0], [0], [0, 0, 1, 0], [], []>} : vector<16x8xbf16>, vector<16x8xbf16>, vector<16x16xf32> -> vector<16x16xf32>
    %c3 = arith.constant 3 : index
    %c0_35 = arith.constant 0 : index
    %c0_36 = arith.constant 0 : index
    %100 = vector.load %arg8[%c3, %c0_35, %c0_36] : memref<4x16x16xbf16, #tpu.memory_space<vmem>>, vector<1x16x16xbf16>
    %101 = vector.shape_cast %100 : vector<1x16x16xbf16> to vector<16x16xbf16>
    %102 = arith.extf %101 : vector<16x16xbf16> to vector<16x16xf32>
    %103 = arith.addf %99, %102 : vector<16x16xf32>
    %cst_37 = arith.constant dense<0xFF800000> : vector<16xf32>
    %104 = vector.multi_reduction <maximumf>, %103, %cst_37 [1] : vector<16x16xf32> to vector<16xf32>
    %105 = vector.shape_cast %104 : vector<16xf32> to vector<16x1xf32>
    %106 = vector.broadcast %105 : vector<16x1xf32> to vector<16x16xf32>
    %107 = arith.subf %103, %106 : vector<16x16xf32>
    %108 = math.exp %107 : vector<16x16xf32>
    %cst_38 = arith.constant dense<0.000000e+00> : vector<16xf32>
    %109 = vector.multi_reduction <add>, %108, %cst_38 [1] : vector<16x16xf32> to vector<16xf32>
    %110 = vector.shape_cast %109 : vector<16xf32> to vector<16x1xf32>
    %111 = tpu.reciprocal %110 {approx = true} : vector<16x1xf32> -> vector<16x1xf32>
    %112 = vector.broadcast %111 : vector<16x1xf32> to vector<16x16xf32>
    %113 = arith.mulf %108, %112 : vector<16x16xf32>
    %114 = arith.truncf %113 : vector<16x16xf32> to vector<16x16xbf16>
    %cst_39 = arith.constant dense<0.000000e+00> : vector<16x8xf32>
    %115 = tpu.matmul %114, %98, %cst_39 {dimension_numbers = #tpu.dot_dimension_numbers<[1], [0], [0], [1], [0, 0, 1, 1], [], []>} : vector<16x16xbf16>, vector<16x8xbf16>, vector<16x8xf32> -> vector<16x8xf32>
    %116 = arith.truncf %115 : vector<16x8xf32> to vector<16x8xbf16>
    %117 = tpu.concatenate %53, %74, %95, %116 in 1 : vector<16x8xbf16>, vector<16x8xbf16>, vector<16x8xbf16>, vector<16x8xbf16> -> vector<16x32xbf16>
    %c0_40 = arith.constant 0 : index
    %c0_41 = arith.constant 0 : index
    %118 = vector.load %arg6[%c0_40, %c0_41] : memref<32x32xbf16, #tpu.memory_space<vmem>>, vector<32x32xbf16>
    %cst_42 = arith.constant dense<0.000000e+00> : vector<16x32xf32>
    %119 = tpu.matmul %117, %118, %cst_42 {dimension_numbers = #tpu.dot_dimension_numbers<[1], [0], [0], [1], [0, 0, 1, 1], [], []>} : vector<16x32xbf16>, vector<32x32xbf16>, vector<16x32xf32> -> vector<16x32xf32>
    %c0_43 = arith.constant 0 : index
    %c0_44 = arith.constant 0 : index
    %120 = vector.load %arg7[%c0_43, %c0_44] : memref<1x32xf32, #tpu.memory_space<vmem>>, vector<1x32xf32>
    %121 = vector.broadcast %120 : vector<1x32xf32> to vector<16x32xf32>
    %122 = arith.addf %119, %121 : vector<16x32xf32>
    %123 = arith.addf %1, %122 : vector<16x32xf32>
    %c0_45 = arith.constant 0 : index
    %c0_46 = arith.constant 0 : index
    %124 = vector.load %arg9[%c0_45, %c0_46] : memref<1x32xf32, #tpu.memory_space<vmem>>, vector<1x32xf32>
    %c0_47 = arith.constant 0 : index
    %c0_48 = arith.constant 0 : index
    %125 = vector.load %arg10[%c0_47, %c0_48] : memref<1x32xf32, #tpu.memory_space<vmem>>, vector<1x32xf32>
    %cst_49 = arith.constant dense<0.000000e+00> : vector<16xf32>
    %126 = vector.multi_reduction <add>, %123, %cst_49 [1] : vector<16x32xf32> to vector<16xf32>
    %127 = vector.shape_cast %126 : vector<16xf32> to vector<16x1xf32>
    %cst_50 = arith.constant 3.200000e+01 : f32
    %128 = vector.broadcast %cst_50 : f32 to vector<16x1xf32>
    %129 = arith.divf %127, %128 : vector<16x1xf32>
    %130 = vector.broadcast %129 : vector<16x1xf32> to vector<16x32xf32>
    %131 = arith.subf %123, %130 : vector<16x32xf32>
    %132 = arith.mulf %131, %131 : vector<16x32xf32>
    %cst_51 = arith.constant dense<0.000000e+00> : vector<16xf32>
    %133 = vector.multi_reduction <add>, %132, %cst_51 [1] : vector<16x32xf32> to vector<16xf32>
    %134 = vector.shape_cast %133 : vector<16xf32> to vector<16x1xf32>
    %cst_52 = arith.constant 3.200000e+01 : f32
    %135 = vector.broadcast %cst_52 : f32 to vector<16x1xf32>
    %136 = arith.divf %134, %135 : vector<16x1xf32>
    %137 = vector.broadcast %129 : vector<16x1xf32> to vector<16x32xf32>
    %138 = arith.subf %123, %137 : vector<16x32xf32>
    %cst_53 = arith.constant 9.99999974E-6 : f32
    %139 = vector.broadcast %cst_53 : f32 to vector<16x1xf32>
    %140 = arith.addf %136, %139 : vector<16x1xf32>
    %141 = math.rsqrt %140 : vector<16x1xf32>
    %142 = vector.broadcast %141 : vector<16x1xf32> to vector<16x32xf32>
    %143 = arith.mulf %138, %142 : vector<16x32xf32>
    %144 = vector.broadcast %124 : vector<1x32xf32> to vector<16x32xf32>
    %145 = arith.mulf %143, %144 : vector<16x32xf32>
    %146 = vector.broadcast %125 : vector<1x32xf32> to vector<16x32xf32>
    %147 = arith.addf %145, %146 : vector<16x32xf32>
    %148 = arith.truncf %147 : vector<16x32xf32> to vector<16x32xbf16>
    %c0_54 = arith.constant 0 : index
    %c0_55 = arith.constant 0 : index
    %149 = vector.load %arg11[%c0_54, %c0_55] : memref<32x128xbf16, #tpu.memory_space<vmem>>, vector<32x128xbf16>
    %cst_56 = arith.constant dense<0.000000e+00> : vector<16x128xf32>
    %150 = tpu.matmul %148, %149, %cst_56 {dimension_numbers = #tpu.dot_dimension_numbers<[1], [0], [0], [1], [0, 0, 1, 1], [], []>} : vector<16x32xbf16>, vector<32x128xbf16>, vector<16x128xf32> -> vector<16x128xf32>
    %c0_57 = arith.constant 0 : index
    %c0_58 = arith.constant 0 : index
    %151 = vector.load %arg12[%c0_57, %c0_58] : memref<1x128xf32, #tpu.memory_space<vmem>>, vector<1x128xf32>
    %152 = vector.broadcast %151 : vector<1x128xf32> to vector<16x128xf32>
    %153 = arith.addf %150, %152 : vector<16x128xf32>
    %154 = arith.truncf %153 : vector<16x128xf32> to vector<16x128xbf16>
    %cst_59 = arith.constant 5.000000e-01 : bf16
    %155 = vector.broadcast %cst_59 : bf16 to vector<16x128xbf16>
    %156 = arith.mulf %155, %154 : vector<16x128xbf16>
    %cst_60 = arith.constant 4.467770e-02 : bf16
    %157 = vector.broadcast %cst_60 : bf16 to vector<16x128xbf16>
    %158 = arith.mulf %157, %154 : vector<16x128xbf16>
    %159 = arith.mulf %158, %154 : vector<16x128xbf16>
    %160 = arith.mulf %159, %154 : vector<16x128xbf16>
    %161 = arith.addf %154, %160 : vector<16x128xbf16>
    %cst_61 = arith.constant 7.968750e-01 : bf16
    %162 = vector.broadcast %cst_61 : bf16 to vector<16x128xbf16>
    %163 = arith.mulf %162, %161 : vector<16x128xbf16>
    %164 = math.tanh %163 : vector<16x128xbf16>
    %cst_62 = arith.constant 1.000000e+00 : bf16
    %165 = vector.broadcast %cst_62 : bf16 to vector<16x128xbf16>
    %166 = arith.addf %165, %164 : vector<16x128xbf16>
    %167 = arith.mulf %156, %166 : vector<16x128xbf16>
    %c0_63 = arith.constant 0 : index
    %c0_64 = arith.constant 0 : index
    %168 = vector.load %arg13[%c0_63, %c0_64] : memref<128x32xbf16, #tpu.memory_space<vmem>>, vector<128x32xbf16>
    %cst_65 = arith.constant dense<0.000000e+00> : vector<16x32xf32>
    %169 = tpu.matmul %167, %168, %cst_65 {dimension_numbers = #tpu.dot_dimension_numbers<[1], [0], [0], [1], [0, 0, 1, 1], [], []>} : vector<16x128xbf16>, vector<128x32xbf16>, vector<16x32xf32> -> vector<16x32xf32>
    %c0_66 = arith.constant 0 : index
    %c0_67 = arith.constant 0 : index
    %170 = vector.load %arg14[%c0_66, %c0_67] : memref<1x32xf32, #tpu.memory_space<vmem>>, vector<1x32xf32>
    %171 = vector.broadcast %170 : vector<1x32xf32> to vector<16x32xf32>
    %172 = arith.addf %169, %171 : vector<16x32xf32>
    %173 = arith.addf %123, %172 : vector<16x32xf32>
    %c0_68 = arith.constant 0 : index
    %c0_69 = arith.constant 0 : index
    %c0_70 = arith.constant 0 : index
    %174 = vector.load %arg15[%c0_68, %c0_69, %c0_70] : memref<1x16x32xf32, #tpu.memory_space<vmem>>, vector<1x16x32xf32>
    %175 = vector.shape_cast %174 : vector<1x16x32xf32> to vector<16x32xf32>
    %176 = vector.shape_cast %173 : vector<16x32xf32> to vector<1x16x32xf32>
    tpu.vector_store %arg15[%c0_68, %c0_69, %c0_70], %176 {strides = array<i32>} : memref<1x16x32xf32, #tpu.memory_space<vmem>>, vector<1x16x32xf32>,
    return
  }
  func.func @transform_0(%arg0: i32) -> (i32, i32, i32) {
    %c0_i32 = arith.constant 0 : i32
    %c0_i32_0 = arith.constant 0 : i32
    %c0_i32_1 = arith.constant 0 : i32
    return %arg0, %c0_i32, %c0_i32_0 : i32, i32, i32
  }
  func.func @transform_1(%arg0: i32) -> (i32, i32) {
    %c0_i32 = arith.constant 0 : i32
    %c0_i32_0 = arith.constant 0 : i32
    %c0_i32_1 = arith.constant 0 : i32
    return %c0_i32, %c0_i32_0 : i32, i32
  }
  func.func @transform_2(%arg0: i32) -> (i32, i32) {
    %c0_i32 = arith.constant 0 : i32
    %c0_i32_0 = arith.constant 0 : i32
    %c0_i32_1 = arith.constant 0 : i32
    return %c0_i32, %c0_i32_0 : i32, i32
  }
  func.func @transform_3(%arg0: i32) -> (i32, i32) {
    %c0_i32 = arith.constant 0 : i32
    %c0_i32_0 = arith.constant 0 : i32
    %c0_i32_1 = arith.constant 0 : i32
    return %c0_i32, %c0_i32_0 : i32, i32
  }
  func.func @transform_4(%arg0: i32) -> (i32, i32) {
    %c0_i32 = arith.constant 0 : i32
    %c0_i32_0 = arith.constant 0 : i32
    %c0_i32_1 = arith.constant 0 : i32
    return %c0_i32, %c0_i32_0 : i32, i32
  }
  func.func @transform_5(%arg0: i32) -> (i32, i32) {
    %c0_i32 = arith.constant 0 : i32
    %c0_i32_0 = arith.constant 0 : i32
    %c0_i32_1 = arith.constant 0 : i32
    return %c0_i32, %c0_i32_0 : i32, i32
  }
  func.func @transform_6(%arg0: i32) -> (i32, i32) {
    %c0_i32 = arith.constant 0 : i32
    %c0_i32_0 = arith.constant 0 : i32
    %c0_i32_1 = arith.constant 0 : i32
    return %c0_i32, %c0_i32_0 : i32, i32
  }
  func.func @transform_7(%arg0: i32) -> (i32, i32, i32) {
    %c0_i32 = arith.constant 0 : i32
    %c0_i32_0 = arith.constant 0 : i32
    %c0_i32_1 = arith.constant 0 : i32
    %c0_i32_2 = arith.constant 0 : i32
    return %c0_i32, %c0_i32_0, %c0_i32_1 : i32, i32, i32
  }
  func.func @transform_8(%arg0: i32) -> (i32, i32) {
    %c0_i32 = arith.constant 0 : i32
    %c0_i32_0 = arith.constant 0 : i32
    %c0_i32_1 = arith.constant 0 : i32
    return %c0_i32, %c0_i32_0 : i32, i32
  }
  func.func @transform_9(%arg0: i32) -> (i32, i32) {
    %c0_i32 = arith.constant 0 : i32
    %c0_i32_0 = arith.constant 0 : i32
    %c0_i32_1 = arith.constant 0 : i32
    return %c0_i32, %c0_i32_0 : i32, i32
  }
  func.func @transform_10(%arg0: i32) -> (i32, i32) {
    %c0_i32 = arith.constant 0 : i32
    %c0_i32_0 = arith.constant 0 : i32
    %c0_i32_1 = arith.constant 0 : i32
    return %c0_i32, %c0_i32_0 : i32, i32
  }
  func.func @transform_11(%arg0: i32) -> (i32, i32) {
    %c0_i32 = arith.constant 0 : i32
    %c0_i32_0 = arith.constant 0 : i32
    %c0_i32_1 = arith.constant 0 : i32
    return %c0_i32, %c0_i32_0 : i32, i32
  }
  func.func @transform_12(%arg0: i32) -> (i32, i32) {
    %c0_i32 = arith.constant 0 : i32
    %c0_i32_0 = arith.constant 0 : i32
    %c0_i32_1 = arith.constant 0 : i32
    return %c0_i32, %c0_i32_0 : i32, i32
  }
  func.func @transform_13(%arg0: i32) -> (i32, i32) {
    %c0_i32 = arith.constant 0 : i32
    %c0_i32_0 = arith.constant 0 : i32
    %c0_i32_1 = arith.constant 0 : i32
    return %c0_i32, %c0_i32_0 : i32, i32
  }
  func.func @transform_14(%arg0: i32) -> (i32, i32, i32) {
    %c0_i32 = arith.constant 0 : i32
    %c0_i32_0 = arith.constant 0 : i32
    %c0_i32_1 = arith.constant 0 : i32
    return %arg0, %c0_i32, %c0_i32_0 : i32, i32, i32
  }
}

</mosaic_0001>

<llo_original>
// kernel: mul.9
$region0: #{mul.9}
  #allocation0 [shape = 's32[1]{0}', space=sflag, size = 0x4, scoped, tag = 'scoped memory for mul.9']
  %s0 = inlined_call_operand.vmem [shape: f32[1,96], index: 0, kind: input, shape index: {}]
  %s1 = inlined_call_operand.vmem [shape: f32[1,96], index: 1, kind: input, shape index: {}]
  %s2 = inlined_call_operand.vmem [shape: f32[1,96], index: 2, kind: output, shape index: {}]
  %v3 = vld [vmem:[%s0] sm:$0x1]
  %v4 = vld [vmem:[%s1] sm:$0x1]
  %5 = xla_tuple %v3, %v4
  %6 = xla_tuple %5
  %v7 = vmul.f32 %v3, %v4
  %8 = xla_tuple %v7
  %9 = vst [vmem:[%s2] sm:$0x1] %v7

// kernel: block_with_rpe_forward.1
$region0: #{block_with_rpe_forward.1}
  #allocation0 [shape = 'u32[]', space=smem, size = 0x4, offset = 0x4, fixed_abs, tag = 'smem constant byte address 0x4 - core index']
  #allocation1 [shape = 'u32[72,128]{1,0:T(1,128)}', space=vmem, size = 0x9000, scoped, tag = 'internal scratch']
  %s0 = inlined_call_operand.hbm [shape: f32[2,16,32], index: 0, kind: input, shape index: {}, may-alias: {0,14}]
  %s1 = inlined_call_operand.vmem [shape: f32[1,32], index: 1, kind: input, shape index: {}]
  %s2 = inlined_call_operand.vmem [shape: f32[1,32], index: 2, kind: input, shape index: {}]
  %s3 = inlined_call_operand.vmem [shape: bf16[32,96], index: 3, kind: input, shape index: {}]
  %s4 = inlined_call_operand.vmem [shape: f32[1,96], index: 4, kind: input, shape index: {}]
  %s5 = inlined_call_operand.vmem [shape: bf16[32,32], index: 5, kind: input, shape index: {}]
  %s6 = inlined_call_operand.vmem [shape: f32[1,32], index: 6, kind: input, shape index: {}]
  %s7 = inlined_call_operand.vmem [shape: bf16[4,16,16], index: 7, kind: input, shape index: {}]
  %s8 = inlined_call_operand.vmem [shape: f32[1,32], index: 8, kind: input, shape index: {}]
  %s9 = inlined_call_operand.vmem [shape: f32[1,32], index: 9, kind: input, shape index: {}]
  %s10 = inlined_call_operand.vmem [shape: bf16[32,128], index: 10, kind: input, shape index: {}]
  %s11 = inlined_call_operand.vmem [shape: f32[1,128], index: 11, kind: input, shape index: {}]
  %s12 = inlined_call_operand.vmem [shape: bf16[128,32], index: 12, kind: input, shape index: {}]
  %s13 = inlined_call_operand.vmem [shape: f32[1,32], index: 13, kind: input, shape index: {}]
  %s14 = inlined_call_operand.hbm [shape: f32[2,16,32], index: 14, kind: output, shape index: {}, may-alias: {0,14}]
  %s15 = sld [smem:[#allocation0]]
  $region93: #{block_with_rpe_forward.1} parent=0
    _
  %s17 = ssub.s32 1, %s15
  %s18 = scalar_select 0, %s17, %s15
  $region1: #{block_with_rpe_forward.1} parent=0
    #allocation2 [shape = 'u8[16384]{0}', space=vmem, size = 0x4000, scoped, tag = 'input window, operand 0']
    #allocation3 [shape = 's32[2]{0}', space=sflag, size = 0x8, scoped, tag = 'scoped memory for block_with_rpe_forward.1']
    #allocation4 [shape = 's32[2]{0}', space=sflag, size = 0x8, scoped, tag = 'scoped memory for block_with_rpe_forward.1']
    #allocation5 [shape = 'u8[16384]{0}', space=vmem, size = 0x4000, scoped, tag = 'output window, operand 0']
    %19 = vsyncpa [#allocation3], 0
    %s20 = scalar_lea.sflag [#allocation3], 1
    %21 = vsyncpa %s20, 0
    %22 = vsyncpa [#allocation4], 0
    %s23 = scalar_lea.sflag [#allocation4], 1
    %24 = vsyncpa %s23, 0
    loop: start=0, step=1, limit=4
    $region2: #{block_with_rpe_forward.1} parent=1 // loop_pre_header
      _
    $region3: #{block_with_rpe_forward.1} parent=1 // loop_header
      %s26 = sphi 0, %s30
      %p27 = scmp.ge.s32.totalorder %s26, 4
      %s36 = sphi 0, %s38
      %s39 = sphi 0, %s36
      %s40 = sphi 0, %s39
      %s56 = sphi 0, %s40
      %s60 = sphi 0, %s60
      %s62 = sphi 0, %s60
      %s63 = sphi 0, %s62
      %s77 = sphi 0, %s63
      %s81 = sphi 0, %s81
      %s83 = sphi 0, %s81
      %s84 = sphi 0, %s83
      %s98 = sphi 0, %s84
      %s102 = sphi 0, %s102
      %s104 = sphi 0, %s102
      %s105 = sphi 0, %s104
      %s119 = sphi 0, %s105
      %s123 = sphi 0, %s123
      %s125 = sphi 0, %s123
      %s126 = sphi 0, %s125
      %s140 = sphi 0, %s126
      %s144 = sphi 0, %s144
      %s146 = sphi 0, %s144
      %s147 = sphi 0, %s146
      %s161 = sphi 0, %s147
      %s165 = sphi 0, %s165
      %s167 = sphi 0, %s165
      %s168 = sphi 0, %s167
      %s182 = sphi 0, %s168
      %s186 = sphi 0, %s186
      %s188 = sphi 0, %s186
      %s189 = sphi 0, %s188
      %s203 = sphi 0, %s189
      %s207 = sphi 0, %s207
      %s209 = sphi 0, %s207
      %s210 = sphi 0, %s209
      %s224 = sphi 0, %s210
      %s228 = sphi 0, %s228
      %s230 = sphi 0, %s228
      %s231 = sphi 0, %s230
      %s245 = sphi 0, %s231
      %s249 = sphi 0, %s249
      %s251 = sphi 0, %s249
      %s252 = sphi 0, %s251
      %s266 = sphi 0, %s252
      %s270 = sphi 0, %s270
      %s272 = sphi 0, %s270
      %s273 = sphi 0, %s272
      %s287 = sphi 0, %s273
      %s291 = sphi 0, %s291
      %s293 = sphi 0, %s291
      %s294 = sphi 0, %s293
      %s308 = sphi 0, %s294
      %s312 = sphi 0, %s312
      %s314 = sphi 0, %s312
      %s315 = sphi 0, %s314
      %s329 = sphi 0, %s315
      %s335 = sphi 0, %s337
      %s338 = sphi 0, %s335
      %s339 = sphi 0, %s338
      %s355 = sphi 0, %s339
    $region4: #{block_with_rpe_forward.1} parent=1 // loop_header_branch
      %29 = sbr.rel (%p27) target = $region8
    $region5: #{block_with_rpe_forward.1} parent=1 // loop_body
      %s31 = ssub.s32 %s26, 1
      %s32 = ssub.s32 %s26, 2
      %s33 = sadd.s32 %s26, 1
      %s34 = ssub.s32 %s26, %s33
      %p35 = scmp.eq.s32.totalorder %s34, 0
      %s37 = sadd.s32 %s36, 1
      %s38 = scalar_select %p35, %s36, %s37
      %p41 = pneg %p35
      %p42 = scmp.eq.s32.totalorder %s26, 1
      %p43 = por %p41, %p42
      %p44 = scmp.ne.s32.totalorder %s36, %s39
      %p45 = scmp.eq.s32.totalorder %s26, 0
      %p46 = por %p44, %p45
      %p47 = scmp.ne.s32.totalorder %s36, %s39
      %p48 = scmp.eq.s32.totalorder %s31, 1
      %p49 = por %p47, %p48
      %p50 = scmp.ne.s32.totalorder %s39, %s40
      %p51 = scmp.eq.s32.totalorder %s31, 0
      %p52 = por %p50, %p51
      %p53 = scmp.ne.s32.totalorder %s39, %s40
      %p54 = scmp.eq.s32.totalorder %s32, 1
      %p55 = por %p53, %p54
      %p57 = scmp.ne.s32.totalorder %s40, %s56
      %p58 = scmp.eq.s32.totalorder %s32, 0
      %p59 = por %p57, %p58
      %s61 = sadd.s32 %s60, 1
      %p64 = scmp.eq.s32.totalorder %s26, 1
      %p65 = scmp.ne.s32.totalorder %s60, %s62
      %p66 = scmp.eq.s32.totalorder %s26, 0
      %p67 = por %p65, %p66
      %p68 = scmp.ne.s32.totalorder %s60, %s62
      %p69 = scmp.eq.s32.totalorder %s31, 1
      %p70 = por %p68, %p69
      %p71 = scmp.ne.s32.totalorder %s62, %s63
      %p72 = scmp.eq.s32.totalorder %s31, 0
      %p73 = por %p71, %p72
      %p74 = scmp.ne.s32.totalorder %s62, %s63
      %p75 = scmp.eq.s32.totalorder %s32, 1
      %p76 = por %p74, %p75
      %p78 = scmp.ne.s32.totalorder %s63, %s77
      %p79 = scmp.eq.s32.totalorder %s32, 0
      %p80 = por %p78, %p79
      %s82 = sadd.s32 %s81, 1
      %p85 = scmp.eq.s32.totalorder %s26, 1
      %p86 = scmp.ne.s32.totalorder %s81, %s83
      %p87 = scmp.eq.s32.totalorder %s26, 0
      %p88 = por %p86, %p87
      %p89 = scmp.ne.s32.totalorder %s81, %s83
      %p90 = scmp.eq.s32.totalorder %s31, 1
      %p91 = por %p89, %p90
      %p92 = scmp.ne.s32.totalorder %s83, %s84
      %p93 = scmp.eq.s32.totalorder %s31, 0
      %p94 = por %p92, %p93
      %p95 = scmp.ne.s32.totalorder %s83, %s84
      %p96 = scmp.eq.s32.totalorder %s32, 1
      %p97 = por %p95, %p96
      %p99 = scmp.ne.s32.totalorder %s84, %s98
      %p100 = scmp.eq.s32.totalorder %s32, 0
      %p101 = por %p99, %p100
      %s103 = sadd.s32 %s102, 1
      %p106 = scmp.eq.s32.totalorder %s26, 1
      %p107 = scmp.ne.s32.totalorder %s102, %s104
      %p108 = scmp.eq.s32.totalorder %s26, 0
      %p109 = por %p107, %p108
      %p110 = scmp.ne.s32.totalorder %s102, %s104
      %p111 = scmp.eq.s32.totalorder %s31, 1
      %p112 = por %p110, %p111
      %p113 = scmp.ne.s32.totalorder %s104, %s105
      %p114 = scmp.eq.s32.totalorder %s31, 0
      %p115 = por %p113, %p114
      %p116 = scmp.ne.s32.totalorder %s104, %s105
      %p117 = scmp.eq.s32.totalorder %s32, 1
      %p118 = por %p116, %p117
      %p120 = scmp.ne.s32.totalorder %s105, %s119
      %p121 = scmp.eq.s32.totalorder %s32, 0
      %p122 = por %p120, %p121
      %s124 = sadd.s32 %s123, 1
      %p127 = scmp.eq.s32.totalorder %s26, 1
      %p128 = scmp.ne.s32.totalorder %s123, %s125
      %p129 = scmp.eq.s32.totalorder %s26, 0
      %p130 = por %p128, %p129
      %p131 = scmp.ne.s32.totalorder %s123, %s125
      %p132 = scmp.eq.s32.totalorder %s31, 1
      %p133 = por %p131, %p132
      %p134 = scmp.ne.s32.totalorder %s125, %s126
      %p135 = scmp.eq.s32.totalorder %s31, 0
      %p136 = por %p134, %p135
      %p137 = scmp.ne.s32.totalorder %s125, %s126
      %p138 = scmp.eq.s32.totalorder %s32, 1
      %p139 = por %p137, %p138
      %p141 = scmp.ne.s32.totalorder %s126, %s140
      %p142 = scmp.eq.s32.totalorder %s32, 0
      %p143 = por %p141, %p142
      %s145 = sadd.s32 %s144, 1
      %p148 = scmp.eq.s32.totalorder %s26, 1
      %p149 = scmp.ne.s32.totalorder %s144, %s146
      %p150 = scmp.eq.s32.totalorder %s26, 0
      %p151 = por %p149, %p150
      %p152 = scmp.ne.s32.totalorder %s144, %s146
      %p153 = scmp.eq.s32.totalorder %s31, 1
      %p154 = por %p152, %p153
      %p155 = scmp.ne.s32.totalorder %s146, %s147
      %p156 = scmp.eq.s32.totalorder %s31, 0
      %p157 = por %p155, %p156
      %p158 = scmp.ne.s32.totalorder %s146, %s147
      %p159 = scmp.eq.s32.totalorder %s32, 1
      %p160 = por %p158, %p159
      %p162 = scmp.ne.s32.totalorder %s147, %s161
      %p163 = scmp.eq.s32.totalorder %s32, 0
      %p164 = por %p162, %p163
      %s166 = sadd.s32 %s165, 1
      %p169 = scmp.eq.s32.totalorder %s26, 1
      %p170 = scmp.ne.s32.totalorder %s165, %s167
      %p171 = scmp.eq.s32.totalorder %s26, 0
      %p172 = por %p170, %p171
      %p173 = scmp.ne.s32.totalorder %s165, %s167
      %p174 = scmp.eq.s32.totalorder %s31, 1
      %p175 = por %p173, %p174
      %p176 = scmp.ne.s32.totalorder %s167, %s168
      %p177 = scmp.eq.s32.totalorder %s31, 0
      %p178 = por %p176, %p177
      %p179 = scmp.ne.s32.totalorder %s167, %s168
      %p180 = scmp.eq.s32.totalorder %s32, 1
      %p181 = por %p179, %p180
      %p183 = scmp.ne.s32.totalorder %s168, %s182
      %p184 = scmp.eq.s32.totalorder %s32, 0
      %p185 = por %p183, %p184
      %s187 = sadd.s32 %s186, 1
      %p190 = scmp.eq.s32.totalorder %s26, 1
      %p191 = scmp.ne.s32.totalorder %s186, %s188
      %p192 = scmp.eq.s32.totalorder %s26, 0
      %p193 = por %p191, %p192
      %p194 = scmp.ne.s32.totalorder %s186, %s188
      %p195 = scmp.eq.s32.totalorder %s31, 1
      %p196 = por %p194, %p195
      %p197 = scmp.ne.s32.totalorder %s188, %s189
      %p198 = scmp.eq.s32.totalorder %s31, 0
      %p199 = por %p197, %p198
      %p200 = scmp.ne.s32.totalorder %s188, %s189
      %p201 = scmp.eq.s32.totalorder %s32, 1
      %p202 = por %p200, %p201
      %p204 = scmp.ne.s32.totalorder %s189, %s203
      %p205 = scmp.eq.s32.totalorder %s32, 0
      %p206 = por %p204, %p205
      %s208 = sadd.s32 %s207, 1
      %p211 = scmp.eq.s32.totalorder %s26, 1
      %p212 = scmp.ne.s32.totalorder %s207, %s209
      %p213 = scmp.eq.s32.totalorder %s26, 0
      %p214 = por %p212, %p213
      %p215 = scmp.ne.s32.totalorder %s207, %s209
      %p216 = scmp.eq.s32.totalorder %s31, 1
      %p217 = por %p215, %p216
      %p218 = scmp.ne.s32.totalorder %s209, %s210
      %p219 = scmp.eq.s32.totalorder %s31, 0
      %p220 = por %p218, %p219
      %p221 = scmp.ne.s32.totalorder %s209, %s210
      %p222 = scmp.eq.s32.totalorder %s32, 1
      %p223 = por %p221, %p222
      %p225 = scmp.ne.s32.totalorder %s210, %s224
      %p226 = scmp.eq.s32.totalorder %s32, 0
      %p227 = por %p225, %p226
      %s229 = sadd.s32 %s228, 1
      %p232 = scmp.eq.s32.totalorder %s26, 1
      %p233 = scmp.ne.s32.totalorder %s228, %s230
      %p234 = scmp.eq.s32.totalorder %s26, 0
      %p235 = por %p233, %p234
      %p236 = scmp.ne.s32.totalorder %s228, %s230
      %p237 = scmp.eq.s32.totalorder %s31, 1
      %p238 = por %p236, %p237
      %p239 = scmp.ne.s32.totalorder %s230, %s231
      %p240 = scmp.eq.s32.totalorder %s31, 0
      %p241 = por %p239, %p240
      %p242 = scmp.ne.s32.totalorder %s230, %s231
      %p243 = scmp.eq.s32.totalorder %s32, 1
      %p244 = por %p242, %p243
      %p246 = scmp.ne.s32.totalorder %s231, %s245
      %p247 = scmp.eq.s32.totalorder %s32, 0
      %p248 = por %p246, %p247
      %s250 = sadd.s32 %s249, 1
      %p253 = scmp.eq.s32.totalorder %s26, 1
      %p254 = scmp.ne.s32.totalorder %s249, %s251
      %p255 = scmp.eq.s32.totalorder %s26, 0
      %p256 = por %p254, %p255
      %p257 = scmp.ne.s32.totalorder %s249, %s251
      %p258 = scmp.eq.s32.totalorder %s31, 1
      %p259 = por %p257, %p258
      %p260 = scmp.ne.s32.totalorder %s251, %s252
      %p261 = scmp.eq.s32.totalorder %s31, 0
      %p262 = por %p260, %p261
      %p263 = scmp.ne.s32.totalorder %s251, %s252
      %p264 = scmp.eq.s32.totalorder %s32, 1
      %p265 = por %p263, %p264
      %p267 = scmp.ne.s32.totalorder %s252, %s266
      %p268 = scmp.eq.s32.totalorder %s32, 0
      %p269 = por %p267, %p268
      %s271 = sadd.s32 %s270, 1
      %p274 = scmp.eq.s32.totalorder %s26, 1
      %p275 = scmp.ne.s32.totalorder %s270, %s272
      %p276 = scmp.eq.s32.totalorder %s26, 0
      %p277 = por %p275, %p276
      %p278 = scmp.ne.s32.totalorder %s270, %s272
      %p279 = scmp.eq.s32.totalorder %s31, 1
      %p280 = por %p278, %p279
      %p281 = scmp.ne.s32.totalorder %s272, %s273
      %p282 = scmp.eq.s32.totalorder %s31, 0
      %p283 = por %p281, %p282
      %p284 = scmp.ne.s32.totalorder %s272, %s273
      %p285 = scmp.eq.s32.totalorder %s32, 1
      %p286 = por %p284, %p285
      %p288 = scmp.ne.s32.totalorder %s273, %s287
      %p289 = scmp.eq.s32.totalorder %s32, 0
      %p290 = por %p288, %p289
      %s292 = sadd.s32 %s291, 1
      %p295 = scmp.eq.s32.totalorder %s26, 1
      %p296 = scmp.ne.s32.totalorder %s291, %s293
      %p297 = scmp.eq.s32.totalorder %s26, 0
      %p298 = por %p296, %p297
      %p299 = scmp.ne.s32.totalorder %s291, %s293
      %p300 = scmp.eq.s32.totalorder %s31, 1
      %p301 = por %p299, %p300
      %p302 = scmp.ne.s32.totalorder %s293, %s294
      %p303 = scmp.eq.s32.totalorder %s31, 0
      %p304 = por %p302, %p303
      %p305 = scmp.ne.s32.totalorder %s293, %s294
      %p306 = scmp.eq.s32.totalorder %s32, 1
      %p307 = por %p305, %p306
      %p309 = scmp.ne.s32.totalorder %s294, %s308
      %p310 = scmp.eq.s32.totalorder %s32, 0
      %p311 = por %p309, %p310
      %s313 = sadd.s32 %s312, 1
      %p316 = scmp.eq.s32.totalorder %s26, 1
      %p317 = scmp.ne.s32.totalorder %s312, %s314
      %p318 = scmp.eq.s32.totalorder %s26, 0
      %p319 = por %p317, %p318
      %p320 = scmp.ne.s32.totalorder %s312, %s314
      %p321 = scmp.eq.s32.totalorder %s31, 1
      %p322 = por %p320, %p321
      %p323 = scmp.ne.s32.totalorder %s314, %s315
      %p324 = scmp.eq.s32.totalorder %s31, 0
      %p325 = por %p323, %p324
      %p326 = scmp.ne.s32.totalorder %s314, %s315
      %p327 = scmp.eq.s32.totalorder %s32, 1
      %p328 = por %p326, %p327
      %p330 = scmp.ne.s32.totalorder %s315, %s329
      %p331 = scmp.eq.s32.totalorder %s32, 0
      %p332 = por %p330, %p331
      %s333 = ssub.s32 %s26, %s33
      %p334 = scmp.eq.s32.totalorder %s333, 0
      %s336 = sadd.s32 %s335, 1
      %s337 = scalar_select %p334, %s335, %s336
      %p340 = pneg %p334
      %p341 = scmp.eq.s32.totalorder %s26, 1
      %p342 = por %p340, %p341
      %p343 = scmp.ne.s32.totalorder %s335, %s338
      %p344 = scmp.eq.s32.totalorder %s26, 0
      %p345 = por %p343, %p344
      %p346 = scmp.ne.s32.totalorder %s335, %s338
      %p347 = scmp.eq.s32.totalorder %s31, 1
      %p348 = por %p346, %p347
      %p349 = scmp.ne.s32.totalorder %s338, %s339
      %p350 = scmp.eq.s32.totalorder %s31, 0
      %p351 = por %p349, %p350
      %p352 = scmp.ne.s32.totalorder %s338, %s339
      %p353 = scmp.eq.s32.totalorder %s32, 1
      %p354 = por %p352, %p353
      %p356 = scmp.ne.s32.totalorder %s339, %s355
      %p357 = scmp.eq.s32.totalorder %s32, 0
      %p358 = por %p356, %p357
      %p359 = scmp.le.s32.totalorder 1, %s26
      %p360 = scmp.lt.s32.totalorder %s26, 3
      %p361 = pnand %p359, %p360
      %p362 = pneg %p361
      // Predicated region
      $region9: #{block_with_rpe_forward.1} parent=5 // pred_check
        _
      $region10: #{block_with_rpe_forward.1} parent=5 // pred_check_branch
        %364 = sbr.rel (%p361) target = $region12
      $region11: #{block_with_rpe_forward.1} parent=5 // pred_region
        %s365 = ssub.s32 %s26, 1
        // Predicated region
        $region13: #{block_with_rpe_forward.1} parent=11 // pred_check
          %p366 = pneg %p73
        $region14: #{block_with_rpe_forward.1} parent=11 // pred_check_branch
          %368 = sbr.rel (%p366) target = $region16
        $region15: #{block_with_rpe_forward.1} parent=11 // pred_region
          _
        $region16: #{block_with_rpe_forward.1} parent=11 // pred_fallthru
          _
        // Predicated region
        $region17: #{block_with_rpe_forward.1} parent=11 // pred_check
          %p369 = pneg %p94
        $region18: #{block_with_rpe_forward.1} parent=11 // pred_check_branch
          %371 = sbr.rel (%p369) target = $region20
        $region19: #{block_with_rpe_forward.1} parent=11 // pred_region
          _
        $region20: #{block_with_rpe_forward.1} parent=11 // pred_fallthru
          _
        // Predicated region
        $region21: #{block_with_rpe_forward.1} parent=11 // pred_check
          %p372 = pneg %p115
        $region22: #{block_with_rpe_forward.1} parent=11 // pred_check_branch
          %374 = sbr.rel (%p372) target = $region24
        $region23: #{block_with_rpe_forward.1} parent=11 // pred_region
          _
        $region24: #{block_with_rpe_forward.1} parent=11 // pred_fallthru
          _
        // Predicated region
        $region25: #{block_with_rpe_forward.1} parent=11 // pred_check
          %p375 = pneg %p136
        $region26: #{block_with_rpe_forward.1} parent=11 // pred_check_branch
          %377 = sbr.rel (%p375) target = $region28
        $region27: #{block_with_rpe_forward.1} parent=11 // pred_region
          _
        $region28: #{block_with_rpe_forward.1} parent=11 // pred_fallthru
          _
        // Predicated region
        $region29: #{block_with_rpe_forward.1} parent=11 // pred_check
          %p378 = pneg %p157
        $region30: #{block_with_rpe_forward.1} parent=11 // pred_check_branch
          %380 = sbr.rel (%p378) target = $region32
        $region31: #{block_with_rpe_forward.1} parent=11 // pred_region
          _
        $region32: #{block_with_rpe_forward.1} parent=11 // pred_fallthru
          _
        // Predicated region
        $region33: #{block_with_rpe_forward.1} parent=11 // pred_check
          %p381 = pneg %p178
        $region34: #{block_with_rpe_forward.1} parent=11 // pred_check_branch
          %383 = sbr.rel (%p381) target = $region36
        $region35: #{block_with_rpe_forward.1} parent=11 // pred_region
          _
        $region36: #{block_with_rpe_forward.1} parent=11 // pred_fallthru
          _
        // Predicated region
        $region37: #{block_with_rpe_forward.1} parent=11 // pred_check
          %p384 = pneg %p199
        $region38: #{block_with_rpe_forward.1} parent=11 // pred_check_branch
          %386 = sbr.rel (%p384) target = $region40
        $region39: #{block_with_rpe_forward.1} parent=11 // pred_region
          _
        $region40: #{block_with_rpe_forward.1} parent=11 // pred_fallthru
          _
        // Predicated region
        $region41: #{block_with_rpe_forward.1} parent=11 // pred_check
          %p387 = pneg %p220
        $region42: #{block_with_rpe_forward.1} parent=11 // pred_check_branch
          %389 = sbr.rel (%p387) target = $region44
        $region43: #{block_with_rpe_forward.1} parent=11 // pred_region
          _
        $region44: #{block_with_rpe_forward.1} parent=11 // pred_fallthru
          _
        // Predicated region
        $region45: #{block_with_rpe_forward.1} parent=11 // pred_check
          %p390 = pneg %p241
        $region46: #{block_with_rpe_forward.1} parent=11 // pred_check_branch
          %392 = sbr.rel (%p390) target = $region48
        $region47: #{block_with_rpe_forward.1} parent=11 // pred_region
          _
        $region48: #{block_with_rpe_forward.1} parent=11 // pred_fallthru
          _
        // Predicated region
        $region49: #{block_with_rpe_forward.1} parent=11 // pred_check
          %p393 = pneg %p262
        $region50: #{block_with_rpe_forward.1} parent=11 // pred_check_branch
          %395 = sbr.rel (%p393) target = $region52
        $region51: #{block_with_rpe_forward.1} parent=11 // pred_region
          _
        $region52: #{block_with_rpe_forward.1} parent=11 // pred_fallthru
          _
        // Predicated region
        $region53: #{block_with_rpe_forward.1} parent=11 // pred_check
          %p396 = pneg %p283
        $region54: #{block_with_rpe_forward.1} parent=11 // pred_check_branch
          %398 = sbr.rel (%p396) target = $region56
        $region55: #{block_with_rpe_forward.1} parent=11 // pred_region
          _
        $region56: #{block_with_rpe_forward.1} parent=11 // pred_fallthru
          _
        // Predicated region
        $region57: #{block_with_rpe_forward.1} parent=11 // pred_check
          %p399 = pneg %p304
        $region58: #{block_with_rpe_forward.1} parent=11 // pred_check_branch
          %401 = sbr.rel (%p399) target = $region60
        $region59: #{block_with_rpe_forward.1} parent=11 // pred_region
          _
        $region60: #{block_with_rpe_forward.1} parent=11 // pred_fallthru
          _
        // Predicated region
        $region61: #{block_with_rpe_forward.1} parent=11 // pred_check
          %p402 = pneg %p325
        $region62: #{block_with_rpe_forward.1} parent=11 // pred_check_branch
          %404 = sbr.rel (%p402) target = $region64
        $region63: #{block_with_rpe_forward.1} parent=11 // pred_region
          _
        $region64: #{block_with_rpe_forward.1} parent=11 // pred_fallthru
          _
      $region12: #{block_with_rpe_forward.1} parent=5 // pred_fallthru
        _
      %p405 = scmp.lt.s32.totalorder %s26, 2
      // Predicated region
      $region65: #{block_with_rpe_forward.1} parent=5 // pred_check
        %p406 = pneg %p405
      $region66: #{block_with_rpe_forward.1} parent=5 // pred_check_branch
        %408 = sbr.rel (%p406) target = $region68
      $region67: #{block_with_rpe_forward.1} parent=5 // pred_region
        // Predicated region
        $region69: #{block_with_rpe_forward.1} parent=67 // pred_check
          %p409 = pneg %p46
        $region70: #{block_with_rpe_forward.1} parent=67 // pred_check_branch
          %411 = sbr.rel (%p409) target = $region72
        $region71: #{block_with_rpe_forward.1} parent=67 // pred_region
          %s412 = sand.u32 %s36, 1
          %s413 = scalar_lea.sflag [#allocation3], %s412
          %s414 = sand.u32 %s36, 1
          %s415 = smul.addr %s414, 16
          %s416 = scalar_lea.vmem [#allocation2], %s415
          %418 = vsyncadd %s413, 0
          %s419 = smul.addr %s26, 2
          %s420 = smul.addr %s419, 8
          %s421 = scalar_lea.hbm %s0, %s420
          %s422 = sshll.u32 %s421, 4
          %s423 = int_to_ptr.hbm [resolvable:$true] %s422
          %s424 = sshll.u32 %s416, 4
          %s425 = int_to_ptr.vmem [resolvable:$true] %s424
          %430 = dma.hbm_to_vmem [thread:$0]  %s423, 256, %s425, %s413, 128, 128, 8
        $region72: #{block_with_rpe_forward.1} parent=67 // pred_fallthru
          _
      $region68: #{block_with_rpe_forward.1} parent=5 // pred_fallthru
        _
      %p431 = scmp.le.s32.totalorder 1, %s26
      %p432 = scmp.lt.s32.totalorder %s26, 3
      %p433 = pnand %p431, %p432
      %p434 = pneg %p433
      // Predicated region
      $region73: #{block_with_rpe_forward.1} parent=5 // pred_check
        _
      $region74: #{block_with_rpe_forward.1} parent=5 // pred_check_branch
        %436 = sbr.rel (%p433) target = $region76
      $region75: #{block_with_rpe_forward.1} parent=5 // pred_region
        %s437 = ssub.s32 %s26, 1
        %s438 = sand.u32 %s39, 1
        %s439 = scalar_lea.sflag [#allocation3], %s438
        %s440 = sand.u32 %s39, 1
        %s441 = smul.addr %s440, 16
        %s442 = scalar_lea.vmem [#allocation2], %s441
        // Predicated region
        $region77: #{block_with_rpe_forward.1} parent=75 // pred_check
          %p443 = pneg %p52
        $region78: #{block_with_rpe_forward.1} parent=75 // pred_check_branch
          %445 = sbr.rel (%p443) target = $region80
        $region79: #{block_with_rpe_forward.1} parent=75 // pred_region
          %447 = dma.done %s439, 256
        $region80: #{block_with_rpe_forward.1} parent=75 // pred_fallthru
          _
        %s448 = sand.u32 %s39, 1
        %s449 = scalar_lea.sflag [#allocation3], %s448
        %s450 = sand.u32 %s39, 1
        %s451 = smul.addr %s450, 16
        %s452 = scalar_lea.vmem [#allocation2], %s451
        %p453 = pneg %p52
        %p454 = pneg %p49
        %p455 = pneg %p73
        %p456 = pneg %p70
        %p457 = pneg %p94
        %p458 = pneg %p91
        %p459 = pneg %p115
        %p460 = pneg %p112
        %p461 = pneg %p136
        %p462 = pneg %p133
        %p463 = pneg %p157
        %p464 = pneg %p154
        %p465 = pneg %p178
        %p466 = pneg %p175
        %p467 = pneg %p199
        %p468 = pneg %p196
        %p469 = pneg %p220
        %p470 = pneg %p217
        %p471 = pneg %p241
        %p472 = pneg %p238
        %p473 = pneg %p262
        %p474 = pneg %p259
        %p475 = pneg %p283
        %p476 = pneg %p280
        %p477 = pneg %p304
        %p478 = pneg %p301
        %p479 = pneg %p325
        %p480 = pneg %p322
        %p481 = pneg %p351
        %p482 = pneg %p348
        %s483 = sand.u32 %s338, 1
        %s484 = scalar_lea.sflag [#allocation4], %s483
        %s485 = sand.u32 %s338, 1
        %s486 = smul.addr %s485, 16
        %s487 = scalar_lea.vmem [#allocation5], %s486
        %v489 = vld [vmem:[%s442] sm:$0xff]
        %v490 = vld [vmem:[%s442 + $0x8] sm:$0xff]
        %v491 = vld [vmem:[%s1] sm:$0x1]
        %v492 = vld [vmem:[%s2] sm:$0x1]
        %vm493 = vcmask 261120
        %v494 = vsel %vm493, %v489, 0.0
        %495 = vadd.xlane.f32.xlu0 %v494
        %v496 = vpop.xlane.xlu0 %495
        %v497 = vsel %vm493, %v490, 0.0
        %498 = vadd.xlane.f32.xlu0 %v497
        %v499 = vpop.xlane.xlu0 %498
        %v500 = vrcp.pop 32.0
        %v501 = vmul.f32 32.0, %v500
        %v502 = vsub.f32 1.0, %v501
        %v503 = vmul.f32 %v500, %v502
        %v504 = vadd.f32 %v500, %v503
        %vm505 = vweird.f32 %v500
        %v506 = vsel %vm505, %v500, %v504
        %v507 = vmul.f32 %v496, %v506
        %v508 = vmul.f32 %v499, %v506
        %v509 = vsub.f32 %v489, %v507
        %v510 = vsub.f32 %v490, %v508
        %v511 = vmul.f32 %v509, %v509
        %v512 = vmul.f32 %v510, %v510
        %v513 = vsel %vm493, %v511, 0.0
        %514 = vadd.xlane.f32.xlu0 %v513
        %v515 = vpop.xlane.xlu0 %514
        %v516 = vsel %vm493, %v512, 0.0
        %517 = vadd.xlane.f32.xlu0 %v516
        %v518 = vpop.xlane.xlu0 %517
        %v519 = vmul.f32 %v515, %v506
        %v520 = vmul.f32 %v518, %v506
        %v521 = vadd.f32 %v519, 1e-05
        %v522 = vadd.f32 %v520, 1e-05
        %v523 = vrsqrt.pop %v521
        %v524 = vmul.f32 %v523, %v521
        %v525 = vmul.f32 %v524, %v523
        %v526 = vmul.f32 0.5, %v525
        %v527 = vsub.f32 1.5, %v526
        %v528 = vmul.f32 %v523, %v527
        %vm529 = vweird.f32 %v521
        %vm530 = vweird.f32 %v523
        %vm531 = vmor %vm529, %vm530
        %v532 = vsel %vm531, %v523, %v528
        %v533 = vrsqrt.pop %v522
        %v534 = vmul.f32 %v533, %v522
        %v535 = vmul.f32 %v534, %v533
        %v536 = vmul.f32 0.5, %v535
        %v537 = vsub.f32 1.5, %v536
        %v538 = vmul.f32 %v533, %v537
        %vm539 = vweird.f32 %v522
        %vm540 = vweird.f32 %v533
        %vm541 = vmor %vm539, %vm540
        %v542 = vsel %vm541, %v533, %v538
        %v543 = vmul.f32 %v509, %v532
        %v544 = vmul.f32 %v510, %v542
        %v546 = vperm.slane %v491, 0
        %v548 = vmul.f32 %v543, %v546
        %v549 = vmul.f32 %v544, %v546
        %v551 = vperm.slane %v492, 0
        %v553 = vadd.f32 %v548, %v551
        %v554 = vadd.f32 %v549, %v551
        %v555 = vpack.c.bf16 %v554, %v553
        %v556 = vld [vmem:[%s3] sm:$0xf]
        %v557 = vld [vmem:[%s3 + $0x4] sm:$0xf]
        %v558 = vld [vmem:[%s3 + $0x8] sm:$0xf]
        %v559 = vld [vmem:[%s3 + $0xc] sm:$0xf]
        %v560 = vld [vmem:[%s4] sm:$0x1]
        %v562 = vperm.slane %v560, 0
        %v568 = vunpack.c.l.b16 %v556
        %v569 = vunpack.c.l.b16 %v557
        %v570 = vunpack.c.l.b16 %v558
        %v571 = vunpack.c.l.b16 %v559
        %v572 = vpack.c.b16 %v569, %v568
        %v573 = vpack.c.b16 %v571, %v570
        %v577 = vsel %vm493, %v555, 0
        %579 = vmatpush.bf16.msra.mxu0 0
        %580 = vmatpush.bf16.msra.mxu0 0
        %581 = vmatpush.bf16.msra.mxu0 0
        %582 = vmatpush.bf16.msra.mxu0 0
        %583 = vmatpush.bf16.msra.mxu0 0
        %584 = vmatpush.bf16.msra.mxu0 0
        %585 = vmatpush.bf16.msra.mxu0 %v573
        %586 = vmatpush.bf16.msra.mxu0 %v572
        %587 = vmatmul.bf16.gmra.mxu0 %v577
        %v588 = vpop.f32.mrf.mxu0
        %v589 = vadd.f32 %v562, %v588
        %v590 = vpop.f32.mrf.mxu0
        %v591 = vadd.f32 %v562, %v590
        %592 = vdwg.mxu0
        %v593 = vpack.c.bf16 %v589, %v589
        %v594 = vpack.c.bf16 %v591, %v591
        %v595 = vld [vmem:[%s7] sm:$0xf]
        %v596 = vld [vmem:[%s7 + $0x4] sm:$0xf]
        %v597 = vunpack.c.l.bf16 %v595
        %v598 = vunpack.c.l.bf16 %v596
        %v601 = vunpack.c.l.b16 %v593
        %v602 = vunpack.c.l.b16 %v594
        %v603 = vpack.c.b16 %v602, %v601
        %604 = vrot.lane.b32.xlu0 %v603, 96
        %v605 = vpop.permute.xlu0 %604
        %vm606 = vcmask 64512
        %v608 = vsel %vm606, %v603, 0
        %v611 = vsel %vm606, %v605, 0
        %613 = vmatpush.bf16.xpose.msra.mxu0 0
        %614 = vmatpush.bf16.xpose.msra.mxu0 0
        %615 = vmatpush.bf16.xpose.msra.mxu0 0
        %616 = vmatpush.bf16.xpose.msra.mxu0 0
        %617 = vmatpush.bf16.xpose.msra.mxu0 0
        %618 = vmatpush.bf16.xpose.msra.mxu0 0
        %619 = vmatpush.bf16.xpose.msra.mxu0 0
        %620 = vmatpush.bf16.xpose.msra.mxu0 %v611
        %621 = vmatmul.bf16.gmra.mxu0 %v608
        %v622 = vpop.f32.mrf.mxu0
        %v623 = vadd.f32 %v597, %v622
        %v624 = vpop.f32.mrf.mxu0
        %v625 = vadd.f32 %v598, %v624
        %626 = vdwg.mxu0
        %vm627 = vcmask 130048
        %v628 = vsel %vm627, %v623, -inf
        %629 = vmax.xlane.f32.xlu0 %v628
        %v630 = vpop.xlane.xlu0 %629
        %v631 = vsel %vm627, %v625, -inf
        %632 = vmax.xlane.f32.xlu0 %v631
        %v633 = vpop.xlane.xlu0 %632
        %v634 = vsub.f32 %v623, %v630
        %v635 = vsub.f32 %v625, %v633
        %v636 = vmul.f32 %v634, 1.442695
        %v637 = vpow.pop %v636
        %v638 = vmul.f32 %v635, 1.442695
        %v639 = vpow.pop %v638
        %v640 = vsel %vm627, %v637, 0.0
        %641 = vadd.xlane.f32.xlu0 %v640
        %v642 = vpop.xlane.xlu0 %641
        %v643 = vsel %vm627, %v639, 0.0
        %644 = vadd.xlane.f32.xlu0 %v643
        %v645 = vpop.xlane.xlu0 %644
        %v646 = vrcp.pop %v642
        %v647 = vrcp.pop %v645
        %v648 = vmul.f32 %v637, %v646
        %v649 = vmul.f32 %v639, %v647
        %v650 = vpack.c.bf16 %v649, %v648
        %651 = vrot.lane.b32.xlu0 %v603, 64
        %v652 = vpop.permute.xlu0 %651
        %v655 = vsel %vm627, %v650, 0
        %657 = vmatpush.bf16.msra.mxu0 0
        %658 = vmatpush.bf16.msra.mxu0 0
        %659 = vmatpush.bf16.msra.mxu0 0
        %660 = vmatpush.bf16.msra.mxu0 0
        %661 = vmatpush.bf16.msra.mxu0 0
        %662 = vmatpush.bf16.msra.mxu0 0
        %663 = vmatpush.bf16.msra.mxu0 0
        %664 = vmatpush.bf16.msra.mxu0 %v652
        %665 = vmatmul.bf16.gmra.mxu0 %v655
        %v666 = vpop.f32.mrf.mxu0
        %v667 = vadd.f32 0.0, %v666
        %v668 = vpop.f32.mrf.mxu0
        %v669 = vadd.f32 0.0, %v668
        %670 = vdwg.mxu0
        %v671 = vpack.c.bf16 %v667, %v667
        %v672 = vpack.c.bf16 %v669, %v669
        %s673 = scalar_lea.vmem %s7, 8
        %v674 = vld [vmem:[%s673] sm:$0xf]
        %v675 = vld [vmem:[%s673 + $0x4] sm:$0xf]
        %v676 = vunpack.c.l.bf16 %v674
        %v677 = vunpack.c.l.bf16 %v675
        %678 = vrot.lane.b32.xlu0 %v603, 120
        %v679 = vpop.permute.xlu0 %678
        %680 = vrot.lane.b32.xlu0 %v603, 88
        %v681 = vpop.permute.xlu0 %680
        %v683 = vsel %vm606, %v679, 0
        %v686 = vsel %vm606, %v681, 0
        %688 = vmatpush.bf16.xpose.msra.mxu0 0
        %689 = vmatpush.bf16.xpose.msra.mxu0 0
        %690 = vmatpush.bf16.xpose.msra.mxu0 0
        %691 = vmatpush.bf16.xpose.msra.mxu0 0
        %692 = vmatpush.bf16.xpose.msra.mxu0 0
        %693 = vmatpush.bf16.xpose.msra.mxu0 0
        %694 = vmatpush.bf16.xpose.msra.mxu0 0
        %695 = vmatpush.bf16.xpose.msra.mxu0 %v686
        %696 = vmatmul.bf16.gmra.mxu0 %v683
        %v697 = vpop.f32.mrf.mxu0
        %v698 = vadd.f32 %v676, %v697
        %v699 = vpop.f32.mrf.mxu0
        %v700 = vadd.f32 %v677, %v699
        %701 = vdwg.mxu0
        %v702 = vsel %vm627, %v698, -inf
        %703 = vmax.xlane.f32.xlu0 %v702
        %v704 = vpop.xlane.xlu0 %703
        %v705 = vsel %vm627, %v700, -inf
        %706 = vmax.xlane.f32.xlu0 %v705
        %v707 = vpop.xlane.xlu0 %706
        %v708 = vsub.f32 %v698, %v704
        %v709 = vsub.f32 %v700, %v707
        %v710 = vmul.f32 %v708, 1.442695
        %v711 = vpow.pop %v710
        %v712 = vmul.f32 %v709, 1.442695
        %v713 = vpow.pop %v712
        %v714 = vsel %vm627, %v711, 0.0
        %715 = vadd.xlane.f32.xlu0 %v714
        %v716 = vpop.xlane.xlu0 %715
        %v717 = vsel %vm627, %v713, 0.0
        %718 = vadd.xlane.f32.xlu0 %v717
        %v719 = vpop.xlane.xlu0 %718
        %v720 = vrcp.pop %v716
        %v721 = vrcp.pop %v719
        %v722 = vmul.f32 %v711, %v720
        %v723 = vmul.f32 %v713, %v721
        %v724 = vpack.c.bf16 %v723, %v722
        %725 = vrot.lane.b32.xlu0 %v603, 56
        %v726 = vpop.permute.xlu0 %725
        %v729 = vsel %vm627, %v724, 0
        %731 = vmatpush.bf16.msra.mxu0 0
        %732 = vmatpush.bf16.msra.mxu0 0
        %733 = vmatpush.bf16.msra.mxu0 0
        %734 = vmatpush.bf16.msra.mxu0 0
        %735 = vmatpush.bf16.msra.mxu0 0
        %736 = vmatpush.bf16.msra.mxu0 0
        %737 = vmatpush.bf16.msra.mxu0 0
        %738 = vmatpush.bf16.msra.mxu0 %v726
        %739 = vmatmul.bf16.gmra.mxu0 %v729
        %v740 = vpop.f32.mrf.mxu0
        %v741 = vadd.f32 0.0, %v740
        %v742 = vpop.f32.mrf.mxu0
        %v743 = vadd.f32 0.0, %v742
        %744 = vdwg.mxu0
        %v745 = vpack.c.bf16 %v741, %v741
        %v746 = vpack.c.bf16 %v743, %v743
        %s747 = scalar_lea.vmem %s7, 16
        %v748 = vld [vmem:[%s747] sm:$0xf]
        %v749 = vld [vmem:[%s747 + $0x4] sm:$0xf]
        %v750 = vunpack.c.l.bf16 %v748
        %v751 = vunpack.c.l.bf16 %v749
        %752 = vrot.lane.b32.xlu0 %v603, 112
        %v753 = vpop.permute.xlu0 %752
        %754 = vrot.lane.b32.xlu0 %v603, 80
        %v755 = vpop.permute.xlu0 %754
        %v757 = vsel %vm606, %v753, 0
        %v760 = vsel %vm606, %v755, 0
        %762 = vmatpush.bf16.xpose.msra.mxu0 0
        %763 = vmatpush.bf16.xpose.msra.mxu0 0
        %764 = vmatpush.bf16.xpose.msra.mxu0 0
        %765 = vmatpush.bf16.xpose.msra.mxu0 0
        %766 = vmatpush.bf16.xpose.msra.mxu0 0
        %767 = vmatpush.bf16.xpose.msra.mxu0 0
        %768 = vmatpush.bf16.xpose.msra.mxu0 0
        %769 = vmatpush.bf16.xpose.msra.mxu0 %v760
        %770 = vmatmul.bf16.gmra.mxu0 %v757
        %v771 = vpop.f32.mrf.mxu0
        %v772 = vadd.f32 %v750, %v771
        %v773 = vpop.f32.mrf.mxu0
        %v774 = vadd.f32 %v751, %v773
        %775 = vdwg.mxu0
        %v776 = vsel %vm627, %v772, -inf
        %777 = vmax.xlane.f32.xlu0 %v776
        %v778 = vpop.xlane.xlu0 %777
        %v779 = vsel %vm627, %v774, -inf
        %780 = vmax.xlane.f32.xlu0 %v779
        %v781 = vpop.xlane.xlu0 %780
        %v782 = vsub.f32 %v772, %v778
        %v783 = vsub.f32 %v774, %v781
        %v784 = vmul.f32 %v782, 1.442695
        %v785 = vpow.pop %v784
        %v786 = vmul.f32 %v783, 1.442695
        %v787 = vpow.pop %v786
        %v788 = vsel %vm627, %v785, 0.0
        %789 = vadd.xlane.f32.xlu0 %v788
        %v790 = vpop.xlane.xlu0 %789
        %v791 = vsel %vm627, %v787, 0.0
        %792 = vadd.xlane.f32.xlu0 %v791
        %v793 = vpop.xlane.xlu0 %792
        %v794 = vrcp.pop %v790
        %v795 = vrcp.pop %v793
        %v796 = vmul.f32 %v785, %v794
        %v797 = vmul.f32 %v787, %v795
        %v798 = vpack.c.bf16 %v797, %v796
        %799 = vrot.lane.b32.xlu0 %v603, 48
        %v800 = vpop.permute.xlu0 %799
        %v803 = vsel %vm627, %v798, 0
        %805 = vmatpush.bf16.msra.mxu0 0
        %806 = vmatpush.bf16.msra.mxu0 0
        %807 = vmatpush.bf16.msra.mxu0 0
        %808 = vmatpush.bf16.msra.mxu0 0
        %809 = vmatpush.bf16.msra.mxu0 0
        %810 = vmatpush.bf16.msra.mxu0 0
        %811 = vmatpush.bf16.msra.mxu0 0
        %812 = vmatpush.bf16.msra.mxu0 %v800
        %813 = vmatmul.bf16.gmra.mxu0 %v803
        %v814 = vpop.f32.mrf.mxu0
        %v815 = vadd.f32 0.0, %v814
        %v816 = vpop.f32.mrf.mxu0
        %v817 = vadd.f32 0.0, %v816
        %818 = vdwg.mxu0
        %v819 = vpack.c.bf16 %v815, %v815
        %v820 = vpack.c.bf16 %v817, %v817
        %s821 = scalar_lea.vmem %s7, 24
        %v822 = vld [vmem:[%s821] sm:$0xf]
        %v823 = vld [vmem:[%s821 + $0x4] sm:$0xf]
        %v824 = vunpack.c.l.bf16 %v822
        %v825 = vunpack.c.l.bf16 %v823
        %826 = vrot.lane.b32.xlu0 %v603, 104
        %v827 = vpop.permute.xlu0 %826
        %828 = vrot.lane.b32.xlu0 %v603, 72
        %v829 = vpop.permute.xlu0 %828
        %v831 = vsel %vm606, %v827, 0
        %v834 = vsel %vm606, %v829, 0
        %836 = vmatpush.bf16.xpose.msra.mxu0 0
        %837 = vmatpush.bf16.xpose.msra.mxu0 0
        %838 = vmatpush.bf16.xpose.msra.mxu0 0
        %839 = vmatpush.bf16.xpose.msra.mxu0 0
        %840 = vmatpush.bf16.xpose.msra.mxu0 0
        %841 = vmatpush.bf16.xpose.msra.mxu0 0
        %842 = vmatpush.bf16.xpose.msra.mxu0 0
        %843 = vmatpush.bf16.xpose.msra.mxu0 %v834
        %844 = vmatmul.bf16.gmra.mxu0 %v831
        %v845 = vpop.f32.mrf.mxu0
        %v846 = vadd.f32 %v824, %v845
        %v847 = vpop.f32.mrf.mxu0
        %v848 = vadd.f32 %v825, %v847
        %849 = vdwg.mxu0
        %v850 = vsel %vm627, %v846, -inf
        %851 = vmax.xlane.f32.xlu0 %v850
        %v852 = vpop.xlane.xlu0 %851
        %v853 = vsel %vm627, %v848, -inf
        %854 = vmax.xlane.f32.xlu0 %v853
        %v855 = vpop.xlane.xlu0 %854
        %v856 = vsub.f32 %v846, %v852
        %v857 = vsub.f32 %v848, %v855
        %v858 = vmul.f32 %v856, 1.442695
        %v859 = vpow.pop %v858
        %v860 = vmul.f32 %v857, 1.442695
        %v861 = vpow.pop %v860
        %v862 = vsel %vm627, %v859, 0.0
        %863 = vadd.xlane.f32.xlu0 %v862
        %v864 = vpop.xlane.xlu0 %863
        %v865 = vsel %vm627, %v861, 0.0
        %866 = vadd.xlane.f32.xlu0 %v865
        %v867 = vpop.xlane.xlu0 %866
        %v868 = vrcp.pop %v864
        %v869 = vrcp.pop %v867
        %v870 = vmul.f32 %v859, %v868
        %v871 = vmul.f32 %v861, %v869
        %v872 = vpack.c.bf16 %v871, %v870
        %873 = vrot.lane.b32.xlu0 %v603, 40
        %v874 = vpop.permute.xlu0 %873
        %v877 = vsel %vm627, %v872, 0
        %879 = vmatpush.bf16.msra.mxu0 0
        %880 = vmatpush.bf16.msra.mxu0 0
        %881 = vmatpush.bf16.msra.mxu0 0
        %882 = vmatpush.bf16.msra.mxu0 0
        %883 = vmatpush.bf16.msra.mxu0 0
        %884 = vmatpush.bf16.msra.mxu0 0
        %885 = vmatpush.bf16.msra.mxu0 0
        %886 = vmatpush.bf16.msra.mxu0 %v874
        %887 = vmatmul.bf16.gmra.mxu0 %v877
        %v888 = vpop.f32.mrf.mxu0
        %v889 = vadd.f32 0.0, %v888
        %v890 = vpop.f32.mrf.mxu0
        %v891 = vadd.f32 0.0, %v890
        %892 = vdwg.mxu0
        %v893 = vpack.c.bf16 %v889, %v889
        %v894 = vpack.c.bf16 %v891, %v891
        %v897 = vunpack.c.l.b16 %v671
        %v898 = vunpack.c.l.b16 %v672
        %v899 = vpack.c.b16 %v898, %v897
        %v902 = vunpack.c.l.b16 %v745
        %v903 = vunpack.c.l.b16 %v746
        %v904 = vpack.c.b16 %v903, %v902
        %905 = vrot.lane.b32.xlu0 %v904, 8
        %v906 = vpop.permute.xlu0 %905
        %v909 = vunpack.c.l.b16 %v819
        %v910 = vunpack.c.l.b16 %v820
        %v911 = vpack.c.b16 %v910, %v909
        %912 = vrot.lane.b32.xlu0 %v911, 16
        %v913 = vpop.permute.xlu0 %912
        %v916 = vunpack.c.l.b16 %v893
        %v917 = vunpack.c.l.b16 %v894
        %v918 = vpack.c.b16 %v917, %v916
        %919 = vrot.lane.b32.xlu0 %v918, 24
        %v920 = vpop.permute.xlu0 %919
        %v923 = vsel %vm606, %v899, %v906
        %v925 = vsel %vm627, %v923, %v913
        %vm926 = vcmask 195584
        %v928 = vsel %vm926, %v925, %v920
        %v929 = vld [vmem:[%s5] sm:$0xf]
        %v930 = vld [vmem:[%s5 + $0x4] sm:$0xf]
        %v931 = vld [vmem:[%s5 + $0x8] sm:$0xf]
        %v932 = vld [vmem:[%s5 + $0xc] sm:$0xf]
        %v933 = vld [vmem:[%s6] sm:$0x1]
        %v935 = vperm.slane %v933, 0
        %v941 = vunpack.c.l.b16 %v929
        %v942 = vunpack.c.l.b16 %v930
        %v943 = vunpack.c.l.b16 %v931
        %v944 = vunpack.c.l.b16 %v932
        %v945 = vpack.c.b16 %v942, %v941
        %v946 = vpack.c.b16 %v944, %v943
        %v949 = vsel %vm493, %v928, 0
        %951 = vmatpush.bf16.msra.mxu0 0
        %952 = vmatpush.bf16.msra.mxu0 0
        %953 = vmatpush.bf16.msra.mxu0 0
        %954 = vmatpush.bf16.msra.mxu0 0
        %955 = vmatpush.bf16.msra.mxu0 0
        %956 = vmatpush.bf16.msra.mxu0 0
        %957 = vmatpush.bf16.msra.mxu0 %v946
        %958 = vmatpush.bf16.msra.mxu0 %v945
        %959 = vmatmul.bf16.gmra.mxu0 %v949
        %v960 = vpop.f32.mrf.mxu0
        %v961 = vadd.f32 %v935, %v960
        %v962 = vpop.f32.mrf.mxu0
        %v963 = vadd.f32 %v935, %v962
        %964 = vdwg.mxu0
        %v965 = vadd.f32 %v489, %v961
        %v966 = vadd.f32 %v490, %v963
        %v967 = vld [vmem:[%s8] sm:$0x1]
        %v968 = vld [vmem:[%s9] sm:$0x1]
        %v969 = vsel %vm493, %v965, 0.0
        %970 = vadd.xlane.f32.xlu0 %v969
        %v971 = vpop.xlane.xlu0 %970
        %v972 = vsel %vm493, %v966, 0.0
        %973 = vadd.xlane.f32.xlu0 %v972
        %v974 = vpop.xlane.xlu0 %973
        %v975 = vmul.f32 %v971, %v506
        %v976 = vmul.f32 %v974, %v506
        %v977 = vsub.f32 %v965, %v975
        %v978 = vsub.f32 %v966, %v976
        %v979 = vmul.f32 %v977, %v977
        %v980 = vmul.f32 %v978, %v978
        %v981 = vsel %vm493, %v979, 0.0
        %982 = vadd.xlane.f32.xlu0 %v981
        %v983 = vpop.xlane.xlu0 %982
        %v984 = vsel %vm493, %v980, 0.0
        %985 = vadd.xlane.f32.xlu0 %v984
        %v986 = vpop.xlane.xlu0 %985
        %v987 = vmul.f32 %v983, %v506
        %v988 = vmul.f32 %v986, %v506
        %v989 = vadd.f32 %v987, 1e-05
        %v990 = vadd.f32 %v988, 1e-05
        %v991 = vrsqrt.pop %v989
        %v992 = vmul.f32 %v991, %v989
        %v993 = vmul.f32 %v992, %v991
        %v994 = vmul.f32 0.5, %v993
        %v995 = vsub.f32 1.5, %v994
        %v996 = vmul.f32 %v991, %v995
        %vm997 = vweird.f32 %v989
        %vm998 = vweird.f32 %v991
        %vm999 = vmor %vm997, %vm998
        %v1000 = vsel %vm999, %v991, %v996
        %v1001 = vrsqrt.pop %v990
        %v1002 = vmul.f32 %v1001, %v990
        %v1003 = vmul.f32 %v1002, %v1001
        %v1004 = vmul.f32 0.5, %v1003
        %v1005 = vsub.f32 1.5, %v1004
        %v1006 = vmul.f32 %v1001, %v1005
        %vm1007 = vweird.f32 %v990
        %vm1008 = vweird.f32 %v1001
        %vm1009 = vmor %vm1007, %vm1008
        %v1010 = vsel %vm1009, %v1001, %v1006
        %v1011 = vmul.f32 %v977, %v1000
        %v1012 = vmul.f32 %v978, %v1010
        %v1014 = vperm.slane %v967, 0
        %v1016 = vmul.f32 %v1011, %v1014
        %v1017 = vmul.f32 %v1012, %v1014
        %v1019 = vperm.slane %v968, 0
        %v1021 = vadd.f32 %v1016, %v1019
        %v1022 = vadd.f32 %v1017, %v1019
        %v1023 = vpack.c.bf16 %v1022, %v1021
        %v1024 = vld [vmem:[%s10] sm:$0xf]
        %v1025 = vld [vmem:[%s10 + $0x4] sm:$0xf]
        %v1026 = vld [vmem:[%s10 + $0x8] sm:$0xf]
        %v1027 = vld [vmem:[%s10 + $0xc] sm:$0xf]
        %v1028 = vld [vmem:[%s11] sm:$0x1]
        %v1030 = vperm.slane %v1028, 0
        %v1036 = vunpack.c.l.b16 %v1024
        %v1037 = vunpack.c.l.b16 %v1025
        %v1038 = vunpack.c.l.b16 %v1026
        %v1039 = vunpack.c.l.b16 %v1027
        %v1040 = vpack.c.b16 %v1037, %v1036
        %v1041 = vpack.c.b16 %v1039, %v1038
        %v1045 = vsel %vm493, %v1023, 0
        %1047 = vmatpush.bf16.msra.mxu0 0
        %1048 = vmatpush.bf16.msra.mxu0 0
        %1049 = vmatpush.bf16.msra.mxu0 0
        %1050 = vmatpush.bf16.msra.mxu0 0
        %1051 = vmatpush.bf16.msra.mxu0 0
        %1052 = vmatpush.bf16.msra.mxu0 0
        %1053 = vmatpush.bf16.msra.mxu0 %v1041
        %1054 = vmatpush.bf16.msra.mxu0 %v1040
        %1055 = vmatmul.bf16.gmra.mxu0 %v1045
        %v1056 = vpop.f32.mrf.mxu0
        %v1057 = vadd.f32 %v1030, %v1056
        %v1058 = vpop.f32.mrf.mxu0
        %v1059 = vadd.f32 %v1030, %v1058
        %1060 = vdwg.mxu0
        %v1061 = vpack.c.bf16 %v1057, %v1057
        %v1062 = vpack.c.bf16 %v1059, %v1059
        %v1063 = vunpack.c.l.bf16 %v1061
        %v1064 = vunpack.c.l.bf16 %v1062
        %v1065 = vmul.f32 %v1063, 0.5
        %v1066 = vmul.f32 %v1064, 0.5
        %v1067 = vpack.c.bf16 %v1065, %v1065
        %v1068 = vpack.c.bf16 %v1066, %v1066
        %v1069 = vmul.f32 %v1063, 0.044677734
        %v1070 = vmul.f32 %v1064, 0.044677734
        %v1071 = vpack.c.bf16 %v1069, %v1069
        %v1072 = vpack.c.bf16 %v1070, %v1070
        %v1073 = vunpack.c.l.bf16 %v1071
        %v1074 = vunpack.c.l.bf16 %v1072
        %v1075 = vmul.f32 %v1073, %v1063
        %v1076 = vmul.f32 %v1074, %v1064
        %v1077 = vpack.c.bf16 %v1075, %v1075
        %v1078 = vpack.c.bf16 %v1076, %v1076
        %v1079 = vunpack.c.l.bf16 %v1077
        %v1080 = vunpack.c.l.bf16 %v1078
        %v1081 = vmul.f32 %v1079, %v1063
        %v1082 = vmul.f32 %v1080, %v1064
        %v1083 = vpack.c.bf16 %v1081, %v1081
        %v1084 = vpack.c.bf16 %v1082, %v1082
        %v1085 = vunpack.c.l.bf16 %v1083
        %v1086 = vunpack.c.l.bf16 %v1084
        %v1087 = vadd.f32 %v1063, %v1085
        %v1088 = vadd.f32 %v1064, %v1086
        %v1089 = vpack.c.bf16 %v1087, %v1087
        %v1090 = vpack.c.bf16 %v1088, %v1088
        %v1091 = vunpack.c.l.bf16 %v1089
        %v1092 = vunpack.c.l.bf16 %v1090
        %v1093 = vmul.f32 %v1091, 0.796875
        %v1094 = vmul.f32 %v1092, 0.796875
        %v1095 = vpack.c.bf16 %v1093, %v1093
        %v1096 = vpack.c.bf16 %v1094, %v1094
        %v1097 = vunpack.c.l.bf16 %v1095
        %v1098 = vunpack.c.l.bf16 %v1096
        %v1099 = vtanh.pop %v1097
        %v1100 = vtanh.pop %v1098
        %v1101 = vpack.c.bf16 %v1099, %v1099
        %v1102 = vpack.c.bf16 %v1100, %v1100
        %v1103 = vunpack.c.l.bf16 %v1101
        %v1104 = vunpack.c.l.bf16 %v1102
        %v1105 = vadd.f32 %v1103, 1.0
        %v1106 = vadd.f32 %v1104, 1.0
        %v1107 = vpack.c.bf16 %v1105, %v1105
        %v1108 = vpack.c.bf16 %v1106, %v1106
        %v1109 = vunpack.c.l.bf16 %v1067
        %v1110 = vunpack.c.l.bf16 %v1068
        %v1111 = vunpack.c.l.bf16 %v1107
        %v1112 = vunpack.c.l.bf16 %v1108
        %v1113 = vmul.f32 %v1109, %v1111
        %v1114 = vmul.f32 %v1110, %v1112
        %v1115 = vpack.c.bf16 %v1114, %v1113
        %v1116 = vld [vmem:[%s12] sm:$0xf]
        %v1117 = vld [vmem:[%s12 + $0x4] sm:$0xf]
        %v1118 = vld [vmem:[%s12 + $0x8] sm:$0xf]
        %v1119 = vld [vmem:[%s12 + $0xc] sm:$0xf]
        %v1120 = vld [vmem:[%s12 + $0x10] sm:$0xf]
        %v1121 = vld [vmem:[%s12 + $0x14] sm:$0xf]
        %v1122 = vld [vmem:[%s12 + $0x18] sm:$0xf]
        %v1123 = vld [vmem:[%s12 + $0x1c] sm:$0xf]
        %v1124 = vld [vmem:[%s12 + $0x20] sm:$0xf]
        %v1125 = vld [vmem:[%s12 + $0x24] sm:$0xf]
        %v1126 = vld [vmem:[%s12 + $0x28] sm:$0xf]
        %v1127 = vld [vmem:[%s12 + $0x2c] sm:$0xf]
        %v1128 = vld [vmem:[%s12 + $0x30] sm:$0xf]
        %v1129 = vld [vmem:[%s12 + $0x34] sm:$0xf]
        %v1130 = vld [vmem:[%s12 + $0x38] sm:$0xf]
        %v1131 = vld [vmem:[%s12 + $0x3c] sm:$0xf]
        %v1132 = vld [vmem:[%s13] sm:$0x1]
        %v1134 = vperm.slane %v1132, 0
        %v1152 = vunpack.c.l.b16 %v1116
        %v1153 = vunpack.c.l.b16 %v1117
        %v1154 = vunpack.c.l.b16 %v1118
        %v1155 = vunpack.c.l.b16 %v1119
        %v1156 = vunpack.c.l.b16 %v1120
        %v1157 = vunpack.c.l.b16 %v1121
        %v1158 = vunpack.c.l.b16 %v1122
        %v1159 = vunpack.c.l.b16 %v1123
        %v1160 = vunpack.c.l.b16 %v1124
        %v1161 = vunpack.c.l.b16 %v1125
        %v1162 = vunpack.c.l.b16 %v1126
        %v1163 = vunpack.c.l.b16 %v1127
        %v1164 = vunpack.c.l.b16 %v1128
        %v1165 = vunpack.c.l.b16 %v1129
        %v1166 = vunpack.c.l.b16 %v1130
        %v1167 = vunpack.c.l.b16 %v1131
        %v1168 = vpack.c.b16 %v1153, %v1152
        %v1169 = vpack.c.b16 %v1155, %v1154
        %v1170 = vpack.c.b16 %v1157, %v1156
        %v1171 = vpack.c.b16 %v1159, %v1158
        %v1172 = vpack.c.b16 %v1161, %v1160
        %v1173 = vpack.c.b16 %v1163, %v1162
        %v1174 = vpack.c.b16 %v1165, %v1164
        %v1175 = vpack.c.b16 %v1167, %v1166
        %1184 = vmatpush.bf16.msra.mxu0 %v1175
        %1185 = vmatpush.bf16.msra.mxu0 %v1174
        %1186 = vmatpush.bf16.msra.mxu0 %v1173
        %1187 = vmatpush.bf16.msra.mxu0 %v1172
        %1188 = vmatpush.bf16.msra.mxu0 %v1171
        %1189 = vmatpush.bf16.msra.mxu0 %v1170
        %1190 = vmatpush.bf16.msra.mxu0 %v1169
        %1191 = vmatpush.bf16.msra.mxu0 %v1168
        %1192 = vmatmul.bf16.gmra.mxu0 %v1115
        %v1193 = vpop.f32.mrf.mxu0
        %v1194 = vadd.f32 %v1134, %v1193
        %v1195 = vpop.f32.mrf.mxu0
        %v1196 = vadd.f32 %v1134, %v1195
        %1197 = vdwg.mxu0
        %v1198 = vadd.f32 %v965, %v1194
        %v1199 = vadd.f32 %v966, %v1196
        %1200 = vst.msk [vmem:[%s487] sm:$0xff] %vm493, %v1198
        %1201 = vst.msk [vmem:[%s487 + $0x8] sm:$0xff] %vm493, %v1199
        %s1202 = sand.u32 %s338, 1
        %s1203 = scalar_lea.sflag [#allocation4], %s1202
        %s1204 = sand.u32 %s338, 1
        %s1205 = smul.addr %s1204, 16
        %s1206 = scalar_lea.vmem [#allocation5], %s1205
        // Predicated region
        $region81: #{block_with_rpe_forward.1} parent=75 // pred_check
          %p1207 = pneg %p348
        $region82: #{block_with_rpe_forward.1} parent=75 // pred_check_branch
          %1209 = sbr.rel (%p1207) target = $region84
        $region83: #{block_with_rpe_forward.1} parent=75 // pred_region
          %1211 = vsyncadd %s1203, 0
          %s1212 = smul.addr %s31, 2
          %s1213 = smul.addr %s1212, 8
          %s1214 = scalar_lea.hbm %s14, %s1213
          %s1215 = sshll.u32 %s1206, 4
          %s1216 = int_to_ptr.vmem [resolvable:$true] %s1215
          %s1217 = sshll.u32 %s1214, 4
          %s1218 = int_to_ptr.hbm [resolvable:$true] %s1217
          %1223 = dma.vmem_to_hbm [thread:$0]  %s1216, 256, %s1218, %s1203, 128, 128, 8
        $region84: #{block_with_rpe_forward.1} parent=75 // pred_fallthru
          _
      $region76: #{block_with_rpe_forward.1} parent=5 // pred_fallthru
        _
      %p1224 = scmp.le.s32.totalorder 2, %s26
      // Predicated region
      $region85: #{block_with_rpe_forward.1} parent=5 // pred_check
        %p1225 = pneg %p1224
      $region86: #{block_with_rpe_forward.1} parent=5 // pred_check_branch
        %1227 = sbr.rel (%p1225) target = $region88
      $region87: #{block_with_rpe_forward.1} parent=5 // pred_region
        %s1228 = ssub.s32 %s26, 2
        // Predicated region
        $region89: #{block_with_rpe_forward.1} parent=87 // pred_check
          %p1229 = pneg %p354
        $region90: #{block_with_rpe_forward.1} parent=87 // pred_check_branch
          %1231 = sbr.rel (%p1229) target = $region92
        $region91: #{block_with_rpe_forward.1} parent=87 // pred_region
          %s1232 = sand.u32 %s339, 1
          %s1233 = scalar_lea.sflag [#allocation4], %s1232
          %s1234 = sand.u32 %s339, 1
          %s1235 = smul.addr %s1234, 16
          %s1236 = scalar_lea.vmem [#allocation5], %s1235
          %1238 = dma.done %s1233, 256
        $region92: #{block_with_rpe_forward.1} parent=87 // pred_fallthru
          _
      $region88: #{block_with_rpe_forward.1} parent=5 // pred_fallthru
        _
    $region6: #{block_with_rpe_forward.1} parent=1 // loop_footer
      %s30 = sadd.s32 1, %s26
    $region7: #{block_with_rpe_forward.1} parent=1 // loop_footer_branch
      %25 = sbr.rel target = $region3
    $region8: #{block_with_rpe_forward.1} parent=1 // loop_exit
      _
    %1239 = vsyncpa [#allocation3], 1
    %s1240 = scalar_lea.sflag [#allocation3], 1
    %1241 = vsyncpa %s1240, 1
    %1242 = vsyncpa [#allocation4], 1
    %s1243 = scalar_lea.sflag [#allocation4], 1
    %1244 = vsyncpa %s1243, 1

</llo_original>
